<compile_context>
chip_gen: v5e
topology: v5e:2x2
jax: 0.10.0
libtpu: 0.0.40
codegen_flags: <defaults>
</compile_context>

<pallas_src>
import jax
import jax.numpy as jnp
from jax.experimental import pallas as pl
from jax.experimental.pallas import tpu as pltpu


def _round_up(n, m):
    return ((n + m - 1) // m) * m


_MIN_GRID_STEPS = 8  # >= 4 steps per TC on v7x (2 TCs); full pipeline overlap on 1-TC chips


def _choose_block_rows(n_rows, requested):
    br = max(8, _round_up(requested, 8))
    br = min(br, _round_up(n_rows, 8))           # never bigger than the (8-padded) batch
    if pl.cdiv(n_rows, br) < _MIN_GRID_STEPS:    # keep the pipeline fed / both TCs busy
        br = max(8, _round_up(pl.cdiv(n_rows, _MIN_GRID_STEPS), 8))
    return br


def _vmem_limit_bytes(budget):
    try:
        phys = int(pltpu.get_tpu_info().vmem_capacity_bytes)
    except Exception:
        phys = 64 << 20                          # conservative fallback (v7x-sized)
    cap = max(phys - (16 << 20), 32 << 20)       # headroom for Mosaic scratch / semaphores
    return int(min(max(budget + (4 << 20), 16 << 20), cap))


def _silu_f32(v):
    # SiLU = v * sigmoid(v); sigmoid via EUP exp + approx reciprocal (vrcp).
    # Elementwise math stays f32 (v5e has no bf16 VPU/EUP).
    return v * pl.reciprocal(1.0 + jnp.exp(-v), approx=True)


def _residual_block_kernel(x_ref, w1_ref, b1_ref, w2_ref, b2_ref, o_ref):
    x = x_ref[...]                                   # f32 [block_rows, D]; residual path stays f32
    x_bf = x.astype(w1_ref.dtype)                    # cast in-kernel (VPU op hidden under DMA/MXU)

    # h = SiLU(lin1(x)) -- MXU bf16 x bf16 -> f32 accumulate; elementwise in f32.
    h = jnp.dot(x_bf, w1_ref[...], preferred_element_type=jnp.float32) + b1_ref[...]
    h = _silu_f32(h)

    # dropout(p=0.2) in eval mode == identity.

    # h = lin2(h) -- intentional precision drop: h is fed to the MXU as bf16 (f32 accumulation).
    h = jnp.dot(h.astype(w2_ref.dtype), w2_ref[...],
                preferred_element_type=jnp.float32) + b2_ref[...]

    # out = SiLU(x + h); residual add in f32, downcast only at the store.
    y = x + h
    o_ref[...] = _silu_f32(y).astype(o_ref.dtype)


def residual_block(x, w1, b1, w2, b2, *, block_rows=1024,
                   weight_dtype=jnp.bfloat16, out_dtype=jnp.bfloat16):
    """x: [N, D]. w1, w2: [D, D] stored as [D_in, D_out] (y = x @ w + b). b1, b2: [D]."""
    N, D = x.shape
    block_rows = _choose_block_rows(N, block_rows)
    grid = (pl.cdiv(N, block_rows),)

    w1_c = w1.astype(weight_dtype)
    w2_c = w2.astype(weight_dtype)
    b1_2d = b1.astype(jnp.float32).reshape(1, D)
    b2_2d = b2.astype(jnp.float32).reshape(1, D)

    x_bytes = jnp.dtype(x.dtype).itemsize
    w_bytes = jnp.dtype(weight_dtype).itemsize
    o_bytes = jnp.dtype(out_dtype).itemsize
    budget = (
        2 * D * D * w_bytes                   # w1 + w2 (resident, single-buffered)
        + 2 * D * 4                           # b1 + b2 (f32)
        + 2 * block_rows * D * x_bytes        # x tile, double-buffered
        + 2 * block_rows * D * o_bytes        # out tile, double-buffered
        + 4 * block_rows * D * 4              # f32 intermediates (h, y) headroom
    )

    resident = dict(pipeline_mode=pl.Buffered(1))   # constant index map -> one VMEM copy

    return pl.pallas_call(
        _residual_block_kernel,
        out_shape=jax.ShapeDtypeStruct((N, D), out_dtype),
        grid_spec=pltpu.PrefetchScalarGridSpec(
            num_scalar_prefetch=0,
            grid=grid,
            in_specs=[
                pl.BlockSpec((block_rows, D), lambda i: (i, 0)),      # x tile (streamed)
                pl.BlockSpec((D, D), lambda i: (0, 0), **resident),   # w1 (resident)
                pl.BlockSpec((1, D), lambda i: (0, 0), **resident),   # b1
                pl.BlockSpec((D, D), lambda i: (0, 0), **resident),   # w2 (resident)
                pl.BlockSpec((1, D), lambda i: (0, 0), **resident),   # b2
            ],
            out_specs=pl.BlockSpec((block_rows, D), lambda i: (i, 0)),
        ),
        compiler_params=pltpu.CompilerParams(
            dimension_semantics=("parallel",),        # row tiles shard across v7x's 2 TCs
            vmem_limit_bytes=_vmem_limit_bytes(budget),
        ),
    )(x, w1_c, b1_2d, w2_c, b2_2d)


def residual_block_ref(x, w1, b1, w2, b2):
    """Pure-JAX f32 reference matching the PyTorch forward (eval mode)."""
    def silu(v):
        return v * jax.nn.sigmoid(v)
    hp = jax.lax.Precision.HIGHEST
    h = silu(jnp.dot(x, w1, precision=hp) + b1)
    h = jnp.dot(h, w2, precision=hp) + b2
    return silu(x + h)


if __name__ == "__main__":
    D = 128          # dim=128 ResidualBlock
    N = 4100         # deliberately ragged: exercises the masked partial final block
    BLOCK_ROWS = 512

    key = jax.random.PRNGKey(0)
    kx, k1, k2, k3, k4 = jax.random.split(key, 5)

    # Deterministic init (uniform +/- 1/sqrt(dim), like nn.Linear default).
    bound = 1.0 / (D ** 0.5)
    x = jax.random.normal(kx, (N, D), dtype=jnp.float32)
    # Weights stored [D_in, D_out] (transposed relative to nn.Linear.weight).
    w1 = jax.random.uniform(k1, (D, D), minval=-bound, maxval=bound, dtype=jnp.float32)
    b1 = jax.random.uniform(k2, (D,), minval=-bound, maxval=bound, dtype=jnp.float32)
    w2 = jax.random.uniform(k3, (D, D), minval=-bound, maxval=bound, dtype=jnp.float32)
    b2 = jax.random.uniform(k4, (D,), minval=-bound, maxval=bound, dtype=jnp.float32)

    out = residual_block(x, w1, b1, w2, b2, block_rows=BLOCK_ROWS)
    out = jax.block_until_ready(out)
    assert out.shape == (N, D)

    # Reference computed in f32 from the same bf16-rounded matmul operands the kernel sees
    # (residual uses f32 x, matching the kernel), so the comparison isolates kernel error
    # (f32 MXU accumulation + approx-reciprocal sigmoid + bf16 output store).
    bf = lambda a: a.astype(jnp.bfloat16).astype(jnp.float32)
    hp = jax.lax.Precision.HIGHEST
    silu = lambda v: v * jax.nn.sigmoid(v)
    h = silu(jnp.dot(bf(x), bf(w1), precision=hp) + b1)
    h = jnp.dot(bf(h), bf(w2), precision=hp) + b2
    ref = silu(x + h)

    out_f32 = out.astype(jnp.float32)
    max_err = float(jnp.max(jnp.abs(out_f32 - ref)))
    assert jnp.allclose(out_f32, ref, atol=3e-2, rtol=3e-2), f"mismatch vs reference (max_err={max_err})"

    # Sanity check against the plain f32 module semantics as well (looser tolerance).
    ref_f32 = residual_block_ref(x, w1, b1, w2, b2)
    assert jnp.allclose(out_f32, ref_f32, atol=6e-2, rtol=6e-2)

    print("KERNEL_OK")
</pallas_src>

<mosaic_0001>
module attributes {stable_mosaic.version = 11 : i64} {
  func.func @_residual_block_kernel(%arg0: i32, %arg1: memref<512x128xf32, #tpu.memory_space<vmem>>, %arg2: memref<128x128xbf16, #tpu.memory_space<vmem>>, %arg3: memref<1x128xf32, #tpu.memory_space<vmem>>, %arg4: memref<128x128xbf16, #tpu.memory_space<vmem>>, %arg5: memref<1x128xf32, #tpu.memory_space<vmem>>, %arg6: memref<512x128xbf16, #tpu.memory_space<vmem>>) attributes {dimension_semantics = [#tpu.dimension_semantics<parallel>], iteration_bounds = array<i64: 9>, scalar_prefetch = 0 : i64, scratch_operands = 0 : i64, tpu.core_type = #tpu.core_type<tc>, window_params = [{transform_indices = @transform_0, window_bounds = array<i64: 512, 128>}, {pipeline_mode = #tpu.pipeline_mode<synchronous>, transform_indices = @transform_1, window_bounds = array<i64: 128, 128>}, {pipeline_mode = #tpu.pipeline_mode<synchronous>, transform_indices = @transform_2, window_bounds = array<i64: 1, 128>}, {pipeline_mode = #tpu.pipeline_mode<synchronous>, transform_indices = @transform_3, window_bounds = array<i64: 128, 128>}, {pipeline_mode = #tpu.pipeline_mode<synchronous>, transform_indices = @transform_4, window_bounds = array<i64: 1, 128>}, {transform_indices = @transform_5, window_bounds = array<i64: 512, 128>}]} {
    %c0 = arith.constant 0 : index
    %c0_0 = arith.constant 0 : index
    %0 = vector.load %arg1[%c0, %c0_0] : memref<512x128xf32, #tpu.memory_space<vmem>>, vector<512x128xf32>
    %1 = arith.truncf %0 : vector<512x128xf32> to vector<512x128xbf16>
    %c0_1 = arith.constant 0 : index
    %c0_2 = arith.constant 0 : index
    %2 = vector.load %arg2[%c0_1, %c0_2] : memref<128x128xbf16, #tpu.memory_space<vmem>>, vector<128x128xbf16>
    %cst = arith.constant dense<0.000000e+00> : vector<512x128xf32>
    %3 = tpu.matmul %1, %2, %cst {dimension_numbers = #tpu.dot_dimension_numbers<[1], [0], [0], [1], [0, 0, 1, 1], [], []>} : vector<512x128xbf16>, vector<128x128xbf16>, vector<512x128xf32> -> vector<512x128xf32>
    %c0_3 = arith.constant 0 : index
    %c0_4 = arith.constant 0 : index
    %4 = vector.load %arg3[%c0_3, %c0_4] : memref<1x128xf32, #tpu.memory_space<vmem>>, vector<1x128xf32>
    %5 = vector.broadcast %4 : vector<1x128xf32> to vector<512x128xf32>
    %6 = arith.addf %3, %5 : vector<512x128xf32>
    %cst_5 = arith.constant 0.000000e+00 : f32
    %7 = vector.broadcast %cst_5 : f32 to vector<512x128xf32>
    %8 = arith.subf %7, %6 : vector<512x128xf32>
    %9 = math.exp %8 : vector<512x128xf32>
    %cst_6 = arith.constant 1.000000e+00 : f32
    %10 = vector.broadcast %cst_6 : f32 to vector<512x128xf32>
    %11 = arith.addf %10, %9 : vector<512x128xf32>
    %12 = tpu.reciprocal %11 {approx = true} : vector<512x128xf32> -> vector<512x128xf32>
    %13 = arith.mulf %6, %12 : vector<512x128xf32>
    %14 = arith.truncf %13 : vector<512x128xf32> to vector<512x128xbf16>
    %c0_7 = arith.constant 0 : index
    %c0_8 = arith.constant 0 : index
    %15 = vector.load %arg4[%c0_7, %c0_8] : memref<128x128xbf16, #tpu.memory_space<vmem>>, vector<128x128xbf16>
    %cst_9 = arith.constant dense<0.000000e+00> : vector<512x128xf32>
    %16 = tpu.matmul %14, %15, %cst_9 {dimension_numbers = #tpu.dot_dimension_numbers<[1], [0], [0], [1], [0, 0, 1, 1], [], []>} : vector<512x128xbf16>, vector<128x128xbf16>, vector<512x128xf32> -> vector<512x128xf32>
    %c0_10 = arith.constant 0 : index
    %c0_11 = arith.constant 0 : index
    %17 = vector.load %arg5[%c0_10, %c0_11] : memref<1x128xf32, #tpu.memory_space<vmem>>, vector<1x128xf32>
    %18 = vector.broadcast %17 : vector<1x128xf32> to vector<512x128xf32>
    %19 = arith.addf %16, %18 : vector<512x128xf32>
    %20 = arith.addf %0, %19 : vector<512x128xf32>
    %cst_12 = arith.constant 0.000000e+00 : f32
    %21 = vector.broadcast %cst_12 : f32 to vector<512x128xf32>
    %22 = arith.subf %21, %20 : vector<512x128xf32>
    %23 = math.exp %22 : vector<512x128xf32>
    %cst_13 = arith.constant 1.000000e+00 : f32
    %24 = vector.broadcast %cst_13 : f32 to vector<512x128xf32>
    %25 = arith.addf %24, %23 : vector<512x128xf32>
    %26 = tpu.reciprocal %25 {approx = true} : vector<512x128xf32> -> vector<512x128xf32>
    %27 = arith.mulf %20, %26 : vector<512x128xf32>
    %28 = arith.truncf %27 : vector<512x128xf32> to vector<512x128xbf16>
    %c0_14 = arith.constant 0 : index
    %c0_15 = arith.constant 0 : index
    %29 = vector.load %arg6[%c0_14, %c0_15] : memref<512x128xbf16, #tpu.memory_space<vmem>>, vector<512x128xbf16>
    tpu.vector_store %arg6[%c0_14, %c0_15], %28 {strides = array<i32>} : memref<512x128xbf16, #tpu.memory_space<vmem>>, vector<512x128xbf16>,
    return
  }
  func.func @transform_0(%arg0: i32) -> (i32, i32) {
    %c0_i32 = arith.constant 0 : i32
    %c0_i32_0 = arith.constant 0 : i32
    return %arg0, %c0_i32 : i32, i32
  }
  func.func @transform_1(%arg0: i32) -> (i32, i32) {
    %c0_i32 = arith.constant 0 : i32
    %c0_i32_0 = arith.constant 0 : i32
    %c0_i32_1 = arith.constant 0 : i32
    return %c0_i32, %c0_i32_0 : i32, i32
  }
  func.func @transform_2(%arg0: i32) -> (i32, i32) {
    %c0_i32 = arith.constant 0 : i32
    %c0_i32_0 = arith.constant 0 : i32
    %c0_i32_1 = arith.constant 0 : i32
    return %c0_i32, %c0_i32_0 : i32, i32
  }
  func.func @transform_3(%arg0: i32) -> (i32, i32) {
    %c0_i32 = arith.constant 0 : i32
    %c0_i32_0 = arith.constant 0 : i32
    %c0_i32_1 = arith.constant 0 : i32
    return %c0_i32, %c0_i32_0 : i32, i32
  }
  func.func @transform_4(%arg0: i32) -> (i32, i32) {
    %c0_i32 = arith.constant 0 : i32
    %c0_i32_0 = arith.constant 0 : i32
    %c0_i32_1 = arith.constant 0 : i32
    return %c0_i32, %c0_i32_0 : i32, i32
  }
  func.func @transform_5(%arg0: i32) -> (i32, i32) {
    %c0_i32 = arith.constant 0 : i32
    %c0_i32_0 = arith.constant 0 : i32
    return %arg0, %c0_i32 : i32, i32
  }
}

</mosaic_0001>

<llo_original>
// kernel: tpu_custom_call.1
$region0: #{tpu_custom_call.1}
  #allocation0 [shape = 'u32[]', space=smem, size = 0x4, offset = 0x4, fixed_abs, tag = 'smem constant byte address 0x4 - core index']
  #allocation1 [shape = 'u32[72,128]{1,0:T(1,128)}', space=vmem, size = 0x9000, scoped, tag = 'internal scratch']
  %s0 = inlined_call_operand.hbm [shape: f32[4100,128], index: 0, kind: input, shape index: {}]
  %s1 = inlined_call_operand.hbm [shape: bf16[128,128], index: 1, kind: input, shape index: {}]
  %s2 = inlined_call_operand.hbm [shape: f32[1,128], index: 2, kind: input, shape index: {}]
  %s3 = inlined_call_operand.hbm [shape: bf16[128,128], index: 3, kind: input, shape index: {}]
  %s4 = inlined_call_operand.hbm [shape: f32[1,128], index: 4, kind: input, shape index: {}]
  %s5 = inlined_call_operand.hbm [shape: bf16[4100,128], index: 5, kind: output, shape index: {}]
  %s6 = sld [smem:[#allocation0]]
  $region73: #{tpu_custom_call.1} parent=0
    _
  %s8 = ssub.s32 1, %s6
  %s9 = scalar_select 0, %s8, %s6
  $region1: #{tpu_custom_call.1} parent=0
    #allocation2 [shape = 'u8[524288]{0}', space=vmem, size = 0x80000, scoped, tag = 'input window, operand 0']
    #allocation3 [shape = 's32[2]{0}', space=sflag, size = 0x8, scoped, tag = 'scoped memory for tpu_custom_call.1']
    #allocation4 [shape = 's32[2]{0}', space=sflag, size = 0x8, scoped, tag = 'scoped memory for tpu_custom_call.1']
    #allocation5 [shape = 'u8[32768]{0}', space=vmem, size = 0x8000, scoped, tag = 'input window, operand 1, single buffered']
    #allocation6 [shape = 's32[1]{0}', space=sflag, size = 0x4, scoped, tag = 'scoped memory for tpu_custom_call.1']
    #allocation7 [shape = 'u8[512]{0}', space=vmem, size = 0x400, scoped, tag = 'input window, operand 2, single buffered']
    #allocation8 [shape = 'u8[32768]{0}', space=vmem, size = 0x8000, scoped, tag = 'input window, operand 3, single buffered']
    #allocation9 [shape = 's32[1]{0}', space=sflag, size = 0x4, scoped, tag = 'scoped memory for tpu_custom_call.1']
    #allocation10 [shape = 'u8[512]{0}', space=vmem, size = 0x400, scoped, tag = 'input window, operand 4, single buffered']
    #allocation11 [shape = 'u8[262144]{0}', space=vmem, size = 0x40000, scoped, tag = 'output window, operand 0']
    %10 = vsyncpa [#allocation3], 0
    %s11 = scalar_lea.sflag [#allocation3], 1
    %12 = vsyncpa %s11, 0
    %13 = vsyncpa [#allocation6], 0
    %14 = vsyncpa [#allocation9], 0
    %15 = vsyncpa [#allocation4], 0
    %s16 = scalar_lea.sflag [#allocation4], 1
    %17 = vsyncpa %s16, 0
    loop: start=0, step=1, limit=11
    $region2: #{tpu_custom_call.1} parent=1 // loop_pre_header
      _
    $region3: #{tpu_custom_call.1} parent=1 // loop_header
      %s19 = sphi 0, %s23
      %p20 = scmp.ge.s32.totalorder %s19, 11
      %s29 = sphi 0, %s31
      %s32 = sphi 0, %s29
      %s33 = sphi 0, %s32
      %s49 = sphi 0, %s33
      %s53 = sphi 0, %s53
      %s55 = sphi 0, %s53
      %s56 = sphi 0, %s55
      %s70 = sphi 0, %s56
      %s74 = sphi 0, %s74
      %s76 = sphi 0, %s74
      %s77 = sphi 0, %s76
      %s91 = sphi 0, %s77
      %s95 = sphi 0, %s95
      %s97 = sphi 0, %s95
      %s98 = sphi 0, %s97
      %s112 = sphi 0, %s98
      %s116 = sphi 0, %s116
      %s118 = sphi 0, %s116
      %s119 = sphi 0, %s118
      %s133 = sphi 0, %s119
      %s139 = sphi 0, %s141
      %s142 = sphi 0, %s139
      %s143 = sphi 0, %s142
      %s159 = sphi 0, %s143
    $region4: #{tpu_custom_call.1} parent=1 // loop_header_branch
      %22 = sbr.rel (%p20) target = $region8
    $region5: #{tpu_custom_call.1} parent=1 // loop_body
      %s24 = ssub.s32 %s19, 1
      %s25 = ssub.s32 %s19, 2
      %s26 = sadd.s32 %s19, 1
      %s27 = ssub.s32 %s19, %s26
      %p28 = scmp.eq.s32.totalorder %s27, 0
      %s30 = sadd.s32 %s29, 1
      %s31 = scalar_select %p28, %s29, %s30
      %p34 = pneg %p28
      %p35 = scmp.eq.s32.totalorder %s19, 8
      %p36 = por %p34, %p35
      %p37 = scmp.ne.s32.totalorder %s29, %s32
      %p38 = scmp.eq.s32.totalorder %s19, 0
      %p39 = por %p37, %p38
      %p40 = scmp.ne.s32.totalorder %s29, %s32
      %p41 = scmp.eq.s32.totalorder %s24, 8
      %p42 = por %p40, %p41
      %p43 = scmp.ne.s32.totalorder %s32, %s33
      %p44 = scmp.eq.s32.totalorder %s24, 0
      %p45 = por %p43, %p44
      %p46 = scmp.ne.s32.totalorder %s32, %s33
      %p47 = scmp.eq.s32.totalorder %s25, 8
      %p48 = por %p46, %p47
      %p50 = scmp.ne.s32.totalorder %s33, %s49
      %p51 = scmp.eq.s32.totalorder %s25, 0
      %p52 = por %p50, %p51
      %s54 = sadd.s32 %s53, 1
      %p57 = scmp.eq.s32.totalorder %s19, 8
      %p58 = scmp.ne.s32.totalorder %s53, %s55
      %p59 = scmp.eq.s32.totalorder %s19, 0
      %p60 = por %p58, %p59
      %p61 = scmp.ne.s32.totalorder %s53, %s55
      %p62 = scmp.eq.s32.totalorder %s24, 8
      %p63 = por %p61, %p62
      %p64 = scmp.ne.s32.totalorder %s55, %s56
      %p65 = scmp.eq.s32.totalorder %s24, 0
      %p66 = por %p64, %p65
      %p67 = scmp.ne.s32.totalorder %s55, %s56
      %p68 = scmp.eq.s32.totalorder %s25, 8
      %p69 = por %p67, %p68
      %p71 = scmp.ne.s32.totalorder %s56, %s70
      %p72 = scmp.eq.s32.totalorder %s25, 0
      %p73 = por %p71, %p72
      %s75 = sadd.s32 %s74, 1
      %p78 = scmp.eq.s32.totalorder %s19, 8
      %p79 = scmp.ne.s32.totalorder %s74, %s76
      %p80 = scmp.eq.s32.totalorder %s19, 0
      %p81 = por %p79, %p80
      %p82 = scmp.ne.s32.totalorder %s74, %s76
      %p83 = scmp.eq.s32.totalorder %s24, 8
      %p84 = por %p82, %p83
      %p85 = scmp.ne.s32.totalorder %s76, %s77
      %p86 = scmp.eq.s32.totalorder %s24, 0
      %p87 = por %p85, %p86
      %p88 = scmp.ne.s32.totalorder %s76, %s77
      %p89 = scmp.eq.s32.totalorder %s25, 8
      %p90 = por %p88, %p89
      %p92 = scmp.ne.s32.totalorder %s77, %s91
      %p93 = scmp.eq.s32.totalorder %s25, 0
      %p94 = por %p92, %p93
      %s96 = sadd.s32 %s95, 1
      %p99 = scmp.eq.s32.totalorder %s19, 8
      %p100 = scmp.ne.s32.totalorder %s95, %s97
      %p101 = scmp.eq.s32.totalorder %s19, 0
      %p102 = por %p100, %p101
      %p103 = scmp.ne.s32.totalorder %s95, %s97
      %p104 = scmp.eq.s32.totalorder %s24, 8
      %p105 = por %p103, %p104
      %p106 = scmp.ne.s32.totalorder %s97, %s98
      %p107 = scmp.eq.s32.totalorder %s24, 0
      %p108 = por %p106, %p107
      %p109 = scmp.ne.s32.totalorder %s97, %s98
      %p110 = scmp.eq.s32.totalorder %s25, 8
      %p111 = por %p109, %p110
      %p113 = scmp.ne.s32.totalorder %s98, %s112
      %p114 = scmp.eq.s32.totalorder %s25, 0
      %p115 = por %p113, %p114
      %s117 = sadd.s32 %s116, 1
      %p120 = scmp.eq.s32.totalorder %s19, 8
      %p121 = scmp.ne.s32.totalorder %s116, %s118
      %p122 = scmp.eq.s32.totalorder %s19, 0
      %p123 = por %p121, %p122
      %p124 = scmp.ne.s32.totalorder %s116, %s118
      %p125 = scmp.eq.s32.totalorder %s24, 8
      %p126 = por %p124, %p125
      %p127 = scmp.ne.s32.totalorder %s118, %s119
      %p128 = scmp.eq.s32.totalorder %s24, 0
      %p129 = por %p127, %p128
      %p130 = scmp.ne.s32.totalorder %s118, %s119
      %p131 = scmp.eq.s32.totalorder %s25, 8
      %p132 = por %p130, %p131
      %p134 = scmp.ne.s32.totalorder %s119, %s133
      %p135 = scmp.eq.s32.totalorder %s25, 0
      %p136 = por %p134, %p135
      %s137 = ssub.s32 %s19, %s26
      %p138 = scmp.eq.s32.totalorder %s137, 0
      %s140 = sadd.s32 %s139, 1
      %s141 = scalar_select %p138, %s139, %s140
      %p144 = pneg %p138
      %p145 = scmp.eq.s32.totalorder %s19, 8
      %p146 = por %p144, %p145
      %p147 = scmp.ne.s32.totalorder %s139, %s142
      %p148 = scmp.eq.s32.totalorder %s19, 0
      %p149 = por %p147, %p148
      %p150 = scmp.ne.s32.totalorder %s139, %s142
      %p151 = scmp.eq.s32.totalorder %s24, 8
      %p152 = por %p150, %p151
      %p153 = scmp.ne.s32.totalorder %s142, %s143
      %p154 = scmp.eq.s32.totalorder %s24, 0
      %p155 = por %p153, %p154
      %p156 = scmp.ne.s32.totalorder %s142, %s143
      %p157 = scmp.eq.s32.totalorder %s25, 8
      %p158 = por %p156, %p157
      %p160 = scmp.ne.s32.totalorder %s143, %s159
      %p161 = scmp.eq.s32.totalorder %s25, 0
      %p162 = por %p160, %p161
      %p163 = scmp.le.s32.totalorder 1, %s19
      %p164 = scmp.lt.s32.totalorder %s19, 10
      %p165 = pnand %p163, %p164
      %p166 = pneg %p165
      // Predicated region
      $region9: #{tpu_custom_call.1} parent=5 // pred_check
        _
      $region10: #{tpu_custom_call.1} parent=5 // pred_check_branch
        %168 = sbr.rel (%p165) target = $region12
      $region11: #{tpu_custom_call.1} parent=5 // pred_region
        %s169 = ssub.s32 %s19, 1
        // Predicated region
        $region13: #{tpu_custom_call.1} parent=11 // pred_check
          %p170 = pneg %p66
        $region14: #{tpu_custom_call.1} parent=11 // pred_check_branch
          %172 = sbr.rel (%p170) target = $region16
        $region15: #{tpu_custom_call.1} parent=11 // pred_region
          %174 = vsyncadd [#allocation6], 0
          %s175 = sshll.u32 %s1, 4
          %s176 = int_to_ptr.hbm [resolvable:$true] %s175
          %s177 = sshll.u32 [#allocation5], 4
          %s178 = int_to_ptr.vmem [resolvable:$true] %s177
          %183 = dma.hbm_to_vmem [thread:$0]  %s176, 1024, %s178, [#allocation6], 64, 64, 4
        $region16: #{tpu_custom_call.1} parent=11 // pred_fallthru
          _
        // Predicated region
        $region17: #{tpu_custom_call.1} parent=11 // pred_check
          %p184 = pneg %p87
        $region18: #{tpu_custom_call.1} parent=11 // pred_check_branch
          %186 = sbr.rel (%p184) target = $region20
        $region19: #{tpu_custom_call.1} parent=11 // pred_region
          %188 = vsyncadd [#allocation6], 0
          %s190 = sshll.u32 %s2, 4
          %s191 = int_to_ptr.hbm [resolvable:$true] %s190
          %s192 = sshll.u32 [#allocation7], 4
          %s193 = int_to_ptr.vmem [resolvable:$true] %s192
          %195 = dma.hbm_to_vmem [thread:$0]  %s191, 16, %s193, [#allocation6]
        $region20: #{tpu_custom_call.1} parent=11 // pred_fallthru
          _
        // Predicated region
        $region21: #{tpu_custom_call.1} parent=11 // pred_check
          %p196 = pneg %p108
        $region22: #{tpu_custom_call.1} parent=11 // pred_check_branch
          %198 = sbr.rel (%p196) target = $region24
        $region23: #{tpu_custom_call.1} parent=11 // pred_region
          %200 = vsyncadd [#allocation9], 0
          %s201 = sshll.u32 %s3, 4
          %s202 = int_to_ptr.hbm [resolvable:$true] %s201
          %s203 = sshll.u32 [#allocation8], 4
          %s204 = int_to_ptr.vmem [resolvable:$true] %s203
          %209 = dma.hbm_to_vmem [thread:$0]  %s202, 1024, %s204, [#allocation9], 64, 64, 4
        $region24: #{tpu_custom_call.1} parent=11 // pred_fallthru
          _
        // Predicated region
        $region25: #{tpu_custom_call.1} parent=11 // pred_check
          %p210 = pneg %p129
        $region26: #{tpu_custom_call.1} parent=11 // pred_check_branch
          %212 = sbr.rel (%p210) target = $region28
        $region27: #{tpu_custom_call.1} parent=11 // pred_region
          %214 = vsyncadd [#allocation9], 0
          %s216 = sshll.u32 %s4, 4
          %s217 = int_to_ptr.hbm [resolvable:$true] %s216
          %s218 = sshll.u32 [#allocation10], 4
          %s219 = int_to_ptr.vmem [resolvable:$true] %s218
          %221 = dma.hbm_to_vmem [thread:$0]  %s217, 16, %s219, [#allocation9]
        $region28: #{tpu_custom_call.1} parent=11 // pred_fallthru
          _
      $region12: #{tpu_custom_call.1} parent=5 // pred_fallthru
        _
      %p222 = scmp.lt.s32.totalorder %s19, 9
      // Predicated region
      $region29: #{tpu_custom_call.1} parent=5 // pred_check
        %p223 = pneg %p222
      $region30: #{tpu_custom_call.1} parent=5 // pred_check_branch
        %225 = sbr.rel (%p223) target = $region32
      $region31: #{tpu_custom_call.1} parent=5 // pred_region
        // Predicated region
        $region33: #{tpu_custom_call.1} parent=31 // pred_check
          %p226 = pneg %p39
        $region34: #{tpu_custom_call.1} parent=31 // pred_check_branch
          %228 = sbr.rel (%p226) target = $region36
        $region35: #{tpu_custom_call.1} parent=31 // pred_region
          %s229 = sand.u32 %s29, 1
          %s230 = scalar_lea.sflag [#allocation3], %s229
          %s231 = sand.u32 %s29, 1
          %s232 = smul.addr %s231, 512
          %s233 = scalar_lea.vmem [#allocation2], %s232
          %s234 = smul.u32 64, %s19
          %s235 = ssub.s32 513, %s234
          %p236 = scmp.lt.s32.totalorder %s235, 64
          %s237 = scalar_select %p236, %s235, 64
          %s238 = smul.u32 8, %s237
          %s239 = ssub.s32 512, %s238
          %s240 = sshll.u32 %s239, 4
          %241 = vsyncadd %s230, %s240
          %p242 = scmp.ne.s32.totalorder 0, %s238
          %s243 = smul.addr %s234, 8
          %s244 = scalar_lea.hbm %s0, %s243
          %s245 = smul.u32 8, %s237
          %s246 = sshll.u32 %s244, 4
          %s247 = int_to_ptr.hbm [resolvable:$true] %s246
          %s248 = sshll.u32 %s233, 4
          %s249 = int_to_ptr.vmem [resolvable:$true] %s248
          %s250 = sshll.u32 %s245, 4
          %254 = dma.hbm_to_vmem [thread:$0]  (%p242), %s247, %s250, %s249, %s230, 128, 128, 8
        $region36: #{tpu_custom_call.1} parent=31 // pred_fallthru
          _
      $region32: #{tpu_custom_call.1} parent=5 // pred_fallthru
        _
      %p255 = scmp.le.s32.totalorder 1, %s19
      %p256 = scmp.lt.s32.totalorder %s19, 10
      %p257 = pnand %p255, %p256
      %p258 = pneg %p257
      // Predicated region
      $region37: #{tpu_custom_call.1} parent=5 // pred_check
        _
      $region38: #{tpu_custom_call.1} parent=5 // pred_check_branch
        %260 = sbr.rel (%p257) target = $region40
      $region39: #{tpu_custom_call.1} parent=5 // pred_region
        %s261 = ssub.s32 %s19, 1
        %s262 = sand.u32 %s32, 1
        %s263 = scalar_lea.sflag [#allocation3], %s262
        %s264 = sand.u32 %s32, 1
        %s265 = smul.addr %s264, 512
        %s266 = scalar_lea.vmem [#allocation2], %s265
        // Predicated region
        $region41: #{tpu_custom_call.1} parent=39 // pred_check
          %p267 = pneg %p45
        $region42: #{tpu_custom_call.1} parent=39 // pred_check_branch
          %269 = sbr.rel (%p267) target = $region44
        $region43: #{tpu_custom_call.1} parent=39 // pred_region
          %271 = dma.done %s263, 8192
        $region44: #{tpu_custom_call.1} parent=39 // pred_fallthru
          _
        // Predicated region
        $region45: #{tpu_custom_call.1} parent=39 // pred_check
          %p272 = pneg %p66
        $region46: #{tpu_custom_call.1} parent=39 // pred_check_branch
          %274 = sbr.rel (%p272) target = $region48
        $region47: #{tpu_custom_call.1} parent=39 // pred_region
          %276 = dma.done [#allocation6], 1024
        $region48: #{tpu_custom_call.1} parent=39 // pred_fallthru
          _
        // Predicated region
        $region49: #{tpu_custom_call.1} parent=39 // pred_check
          %p277 = pneg %p87
        $region50: #{tpu_custom_call.1} parent=39 // pred_check_branch
          %279 = sbr.rel (%p277) target = $region52
        $region51: #{tpu_custom_call.1} parent=39 // pred_region
          %281 = dma.done [#allocation6], 16
        $region52: #{tpu_custom_call.1} parent=39 // pred_fallthru
          _
        // Predicated region
        $region53: #{tpu_custom_call.1} parent=39 // pred_check
          %p282 = pneg %p108
        $region54: #{tpu_custom_call.1} parent=39 // pred_check_branch
          %284 = sbr.rel (%p282) target = $region56
        $region55: #{tpu_custom_call.1} parent=39 // pred_region
          %286 = dma.done [#allocation9], 1024
        $region56: #{tpu_custom_call.1} parent=39 // pred_fallthru
          _
        // Predicated region
        $region57: #{tpu_custom_call.1} parent=39 // pred_check
          %p287 = pneg %p129
        $region58: #{tpu_custom_call.1} parent=39 // pred_check_branch
          %289 = sbr.rel (%p287) target = $region60
        $region59: #{tpu_custom_call.1} parent=39 // pred_region
          %291 = dma.done [#allocation9], 16
        $region60: #{tpu_custom_call.1} parent=39 // pred_fallthru
          _
        %s292 = sand.u32 %s32, 1
        %s293 = scalar_lea.sflag [#allocation3], %s292
        %s294 = sand.u32 %s32, 1
        %s295 = smul.addr %s294, 512
        %s296 = scalar_lea.vmem [#allocation2], %s295
        %p297 = pneg %p45
        %p298 = pneg %p42
        %p299 = pneg %p66
        %p300 = pneg %p63
        %p301 = pneg %p87
        %p302 = pneg %p84
        %p303 = pneg %p108
        %p304 = pneg %p105
        %p305 = pneg %p129
        %p306 = pneg %p126
        %p307 = pneg %p155
        %p308 = pneg %p152
        %s309 = sand.u32 %s142, 1
        %s310 = scalar_lea.sflag [#allocation4], %s309
        %s311 = sand.u32 %s142, 1
        %s312 = smul.addr %s311, 256
        %s313 = scalar_lea.vmem [#allocation11], %s312
        %s314 = smul.u32 64, %s24
        %s315 = ssub.s32 513, %s314
        %p316 = scmp.lt.s32.totalorder %s315, 64
        %s317 = scalar_select %p316, %s315, 64
        %s318 = smul.u32 8, %s317
        %s319 = smul.u32 64, %s24
        %s320 = ssub.s32 513, %s319
        %p321 = scmp.lt.s32.totalorder %s320, 64
        %s322 = scalar_select %p321, %s320, 64
        %s323 = smul.u32 4, %s322
        %v324 = vld [vmem:[%s266] sm:$0xff]
        %v325 = vld [vmem:[%s266 + $0x8] sm:$0xff]
        %v326 = vld [vmem:[%s266 + $0x10] sm:$0xff]
        %v327 = vld [vmem:[%s266 + $0x18] sm:$0xff]
        %v328 = vld [vmem:[%s266 + $0x20] sm:$0xff]
        %v329 = vld [vmem:[%s266 + $0x28] sm:$0xff]
        %v330 = vld [vmem:[%s266 + $0x30] sm:$0xff]
        %v331 = vld [vmem:[%s266 + $0x38] sm:$0xff]
        %v332 = vld [vmem:[%s266 + $0x40] sm:$0xff]
        %v333 = vld [vmem:[%s266 + $0x48] sm:$0xff]
        %v334 = vld [vmem:[%s266 + $0x50] sm:$0xff]
        %v335 = vld [vmem:[%s266 + $0x58] sm:$0xff]
        %v336 = vld [vmem:[%s266 + $0x60] sm:$0xff]
        %v337 = vld [vmem:[%s266 + $0x68] sm:$0xff]
        %v338 = vld [vmem:[%s266 + $0x70] sm:$0xff]
        %v339 = vld [vmem:[%s266 + $0x78] sm:$0xff]
        %v340 = vld [vmem:[%s266 + $0x80] sm:$0xff]
        %v341 = vld [vmem:[%s266 + $0x88] sm:$0xff]
        %v342 = vld [vmem:[%s266 + $0x90] sm:$0xff]
        %v343 = vld [vmem:[%s266 + $0x98] sm:$0xff]
        %v344 = vld [vmem:[%s266 + $0xa0] sm:$0xff]
        %v345 = vld [vmem:[%s266 + $0xa8] sm:$0xff]
        %v346 = vld [vmem:[%s266 + $0xb0] sm:$0xff]
        %v347 = vld [vmem:[%s266 + $0xb8] sm:$0xff]
        %v348 = vld [vmem:[%s266 + $0xc0] sm:$0xff]
        %v349 = vld [vmem:[%s266 + $0xc8] sm:$0xff]
        %v350 = vld [vmem:[%s266 + $0xd0] sm:$0xff]
        %v351 = vld [vmem:[%s266 + $0xd8] sm:$0xff]
        %v352 = vld [vmem:[%s266 + $0xe0] sm:$0xff]
        %v353 = vld [vmem:[%s266 + $0xe8] sm:$0xff]
        %v354 = vld [vmem:[%s266 + $0xf0] sm:$0xff]
        %v355 = vld [vmem:[%s266 + $0xf8] sm:$0xff]
        %v356 = vld [vmem:[%s266 + $0x100] sm:$0xff]
        %v357 = vld [vmem:[%s266 + $0x108] sm:$0xff]
        %v358 = vld [vmem:[%s266 + $0x110] sm:$0xff]
        %v359 = vld [vmem:[%s266 + $0x118] sm:$0xff]
        %v360 = vld [vmem:[%s266 + $0x120] sm:$0xff]
        %v361 = vld [vmem:[%s266 + $0x128] sm:$0xff]
        %v362 = vld [vmem:[%s266 + $0x130] sm:$0xff]
        %v363 = vld [vmem:[%s266 + $0x138] sm:$0xff]
        %v364 = vld [vmem:[%s266 + $0x140] sm:$0xff]
        %v365 = vld [vmem:[%s266 + $0x148] sm:$0xff]
        %v366 = vld [vmem:[%s266 + $0x150] sm:$0xff]
        %v367 = vld [vmem:[%s266 + $0x158] sm:$0xff]
        %v368 = vld [vmem:[%s266 + $0x160] sm:$0xff]
        %v369 = vld [vmem:[%s266 + $0x168] sm:$0xff]
        %v370 = vld [vmem:[%s266 + $0x170] sm:$0xff]
        %v371 = vld [vmem:[%s266 + $0x178] sm:$0xff]
        %v372 = vld [vmem:[%s266 + $0x180] sm:$0xff]
        %v373 = vld [vmem:[%s266 + $0x188] sm:$0xff]
        %v374 = vld [vmem:[%s266 + $0x190] sm:$0xff]
        %v375 = vld [vmem:[%s266 + $0x198] sm:$0xff]
        %v376 = vld [vmem:[%s266 + $0x1a0] sm:$0xff]
        %v377 = vld [vmem:[%s266 + $0x1a8] sm:$0xff]
        %v378 = vld [vmem:[%s266 + $0x1b0] sm:$0xff]
        %v379 = vld [vmem:[%s266 + $0x1b8] sm:$0xff]
        %v380 = vld [vmem:[%s266 + $0x1c0] sm:$0xff]
        %v381 = vld [vmem:[%s266 + $0x1c8] sm:$0xff]
        %v382 = vld [vmem:[%s266 + $0x1d0] sm:$0xff]
        %v383 = vld [vmem:[%s266 + $0x1d8] sm:$0xff]
        %v384 = vld [vmem:[%s266 + $0x1e0] sm:$0xff]
        %v385 = vld [vmem:[%s266 + $0x1e8] sm:$0xff]
        %v386 = vld [vmem:[%s266 + $0x1f0] sm:$0xff]
        %v387 = vld [vmem:[%s266 + $0x1f8] sm:$0xff]
        %v388 = vpack.c.bf16 %v325, %v324
        %v389 = vpack.c.bf16 %v327, %v326
        %v390 = vpack.c.bf16 %v329, %v328
        %v391 = vpack.c.bf16 %v331, %v330
        %v392 = vpack.c.bf16 %v333, %v332
        %v393 = vpack.c.bf16 %v335, %v334
        %v394 = vpack.c.bf16 %v337, %v336
        %v395 = vpack.c.bf16 %v339, %v338
        %v396 = vpack.c.bf16 %v341, %v340
        %v397 = vpack.c.bf16 %v343, %v342
        %v398 = vpack.c.bf16 %v345, %v344
        %v399 = vpack.c.bf16 %v347, %v346
        %v400 = vpack.c.bf16 %v349, %v348
        %v401 = vpack.c.bf16 %v351, %v350
        %v402 = vpack.c.bf16 %v353, %v352
        %v403 = vpack.c.bf16 %v355, %v354
        %v404 = vpack.c.bf16 %v357, %v356
        %v405 = vpack.c.bf16 %v359, %v358
        %v406 = vpack.c.bf16 %v361, %v360
        %v407 = vpack.c.bf16 %v363, %v362
        %v408 = vpack.c.bf16 %v365, %v364
        %v409 = vpack.c.bf16 %v367, %v366
        %v410 = vpack.c.bf16 %v369, %v368
        %v411 = vpack.c.bf16 %v371, %v370
        %v412 = vpack.c.bf16 %v373, %v372
        %v413 = vpack.c.bf16 %v375, %v374
        %v414 = vpack.c.bf16 %v377, %v376
        %v415 = vpack.c.bf16 %v379, %v378
        %v416 = vpack.c.bf16 %v381, %v380
        %v417 = vpack.c.bf16 %v383, %v382
        %v418 = vpack.c.bf16 %v385, %v384
        %v419 = vpack.c.bf16 %v387, %v386
        %v420 = vld [vmem:[#allocation5] sm:$0xf]
        %v421 = vld [vmem:[#allocation5 + $0x4] sm:$0xf]
        %v422 = vld [vmem:[#allocation5 + $0x8] sm:$0xf]
        %v423 = vld [vmem:[#allocation5 + $0xc] sm:$0xf]
        %v424 = vld [vmem:[#allocation5 + $0x10] sm:$0xf]
        %v425 = vld [vmem:[#allocation5 + $0x14] sm:$0xf]
        %v426 = vld [vmem:[#allocation5 + $0x18] sm:$0xf]
        %v427 = vld [vmem:[#allocation5 + $0x1c] sm:$0xf]
        %v428 = vld [vmem:[#allocation5 + $0x20] sm:$0xf]
        %v429 = vld [vmem:[#allocation5 + $0x24] sm:$0xf]
        %v430 = vld [vmem:[#allocation5 + $0x28] sm:$0xf]
        %v431 = vld [vmem:[#allocation5 + $0x2c] sm:$0xf]
        %v432 = vld [vmem:[#allocation5 + $0x30] sm:$0xf]
        %v433 = vld [vmem:[#allocation5 + $0x34] sm:$0xf]
        %v434 = vld [vmem:[#allocation5 + $0x38] sm:$0xf]
        %v435 = vld [vmem:[#allocation5 + $0x3c] sm:$0xf]
        %v436 = vld [vmem:[#allocation7] sm:$0x1]
        %v438 = vperm.slane %v436, 0
        %v456 = vunpack.c.l.b16 %v420
        %v457 = vunpack.c.l.b16 %v421
        %v458 = vunpack.c.l.b16 %v422
        %v459 = vunpack.c.l.b16 %v423
        %v460 = vunpack.c.l.b16 %v424
        %v461 = vunpack.c.l.b16 %v425
        %v462 = vunpack.c.l.b16 %v426
        %v463 = vunpack.c.l.b16 %v427
        %v464 = vunpack.c.l.b16 %v428
        %v465 = vunpack.c.l.b16 %v429
        %v466 = vunpack.c.l.b16 %v430
        %v467 = vunpack.c.l.b16 %v431
        %v468 = vunpack.c.l.b16 %v432
        %v469 = vunpack.c.l.b16 %v433
        %v470 = vunpack.c.l.b16 %v434
        %v471 = vunpack.c.l.b16 %v435
        %v472 = vpack.c.b16 %v457, %v456
        %v473 = vpack.c.b16 %v459, %v458
        %v474 = vpack.c.b16 %v461, %v460
        %v475 = vpack.c.b16 %v463, %v462
        %v476 = vpack.c.b16 %v465, %v464
        %v477 = vpack.c.b16 %v467, %v466
        %v478 = vpack.c.b16 %v469, %v468
        %v479 = vpack.c.b16 %v471, %v470
        %488 = vmatpush.bf16.msra.mxu0 %v479
        %489 = vmatpush.bf16.msra.mxu0 %v478
        %490 = vmatpush.bf16.msra.mxu0 %v477
        %491 = vmatpush.bf16.msra.mxu0 %v476
        %492 = vmatpush.bf16.msra.mxu0 %v475
        %493 = vmatpush.bf16.msra.mxu0 %v474
        %494 = vmatpush.bf16.msra.mxu0 %v473
        %495 = vmatpush.bf16.msra.mxu0 %v472
        %496 = vmatmul.bf16.gmra.mxu0 %v388
        %v497 = vpop.f32.mrf.mxu0
        %v498 = vadd.f32 %v438, %v497
        %v499 = vpop.f32.mrf.mxu0
        %v500 = vadd.f32 %v438, %v499
        %501 = vmatmul.bf16.gmra.mxu0 %v389
        %v502 = vpop.f32.mrf.mxu0
        %v503 = vadd.f32 %v438, %v502
        %v504 = vpop.f32.mrf.mxu0
        %v505 = vadd.f32 %v438, %v504
        %506 = vmatmul.bf16.gmra.mxu0 %v390
        %v507 = vpop.f32.mrf.mxu0
        %v508 = vadd.f32 %v438, %v507
        %v509 = vpop.f32.mrf.mxu0
        %v510 = vadd.f32 %v438, %v509
        %511 = vmatmul.bf16.gmra.mxu0 %v391
        %v512 = vpop.f32.mrf.mxu0
        %v513 = vadd.f32 %v438, %v512
        %v514 = vpop.f32.mrf.mxu0
        %v515 = vadd.f32 %v438, %v514
        %516 = vmatmul.bf16.gmra.mxu0 %v392
        %v517 = vpop.f32.mrf.mxu0
        %v518 = vadd.f32 %v438, %v517
        %v519 = vpop.f32.mrf.mxu0
        %v520 = vadd.f32 %v438, %v519
        %521 = vmatmul.bf16.gmra.mxu0 %v393
        %v522 = vpop.f32.mrf.mxu0
        %v523 = vadd.f32 %v438, %v522
        %v524 = vpop.f32.mrf.mxu0
        %v525 = vadd.f32 %v438, %v524
        %526 = vmatmul.bf16.gmra.mxu0 %v394
        %v527 = vpop.f32.mrf.mxu0
        %v528 = vadd.f32 %v438, %v527
        %v529 = vpop.f32.mrf.mxu0
        %v530 = vadd.f32 %v438, %v529
        %531 = vmatmul.bf16.gmra.mxu0 %v395
        %v532 = vpop.f32.mrf.mxu0
        %v533 = vadd.f32 %v438, %v532
        %v534 = vpop.f32.mrf.mxu0
        %v535 = vadd.f32 %v438, %v534
        %536 = vmatmul.bf16.gmra.mxu0 %v396
        %v537 = vpop.f32.mrf.mxu0
        %v538 = vadd.f32 %v438, %v537
        %v539 = vpop.f32.mrf.mxu0
        %v540 = vadd.f32 %v438, %v539
        %541 = vmatmul.bf16.gmra.mxu0 %v397
        %v542 = vpop.f32.mrf.mxu0
        %v543 = vadd.f32 %v438, %v542
        %v544 = vpop.f32.mrf.mxu0
        %v545 = vadd.f32 %v438, %v544
        %546 = vmatmul.bf16.gmra.mxu0 %v398
        %v547 = vpop.f32.mrf.mxu0
        %v548 = vadd.f32 %v438, %v547
        %v549 = vpop.f32.mrf.mxu0
        %v550 = vadd.f32 %v438, %v549
        %551 = vmatmul.bf16.gmra.mxu0 %v399
        %v552 = vpop.f32.mrf.mxu0
        %v553 = vadd.f32 %v438, %v552
        %v554 = vpop.f32.mrf.mxu0
        %v555 = vadd.f32 %v438, %v554
        %556 = vmatmul.bf16.gmra.mxu0 %v400
        %v557 = vpop.f32.mrf.mxu0
        %v558 = vadd.f32 %v438, %v557
        %v559 = vpop.f32.mrf.mxu0
        %v560 = vadd.f32 %v438, %v559
        %561 = vmatmul.bf16.gmra.mxu0 %v401
        %v562 = vpop.f32.mrf.mxu0
        %v563 = vadd.f32 %v438, %v562
        %v564 = vpop.f32.mrf.mxu0
        %v565 = vadd.f32 %v438, %v564
        %566 = vmatmul.bf16.gmra.mxu0 %v402
        %v567 = vpop.f32.mrf.mxu0
        %v568 = vadd.f32 %v438, %v567
        %v569 = vpop.f32.mrf.mxu0
        %v570 = vadd.f32 %v438, %v569
        %571 = vmatmul.bf16.gmra.mxu0 %v403
        %v572 = vpop.f32.mrf.mxu0
        %v573 = vadd.f32 %v438, %v572
        %v574 = vpop.f32.mrf.mxu0
        %v575 = vadd.f32 %v438, %v574
        %576 = vmatmul.bf16.gmra.mxu0 %v404
        %v577 = vpop.f32.mrf.mxu0
        %v578 = vadd.f32 %v438, %v577
        %v579 = vpop.f32.mrf.mxu0
        %v580 = vadd.f32 %v438, %v579
        %581 = vmatmul.bf16.gmra.mxu0 %v405
        %v582 = vpop.f32.mrf.mxu0
        %v583 = vadd.f32 %v438, %v582
        %v584 = vpop.f32.mrf.mxu0
        %v585 = vadd.f32 %v438, %v584
        %586 = vmatmul.bf16.gmra.mxu0 %v406
        %v587 = vpop.f32.mrf.mxu0
        %v588 = vadd.f32 %v438, %v587
        %v589 = vpop.f32.mrf.mxu0
        %v590 = vadd.f32 %v438, %v589
        %591 = vmatmul.bf16.gmra.mxu0 %v407
        %v592 = vpop.f32.mrf.mxu0
        %v593 = vadd.f32 %v438, %v592
        %v594 = vpop.f32.mrf.mxu0
        %v595 = vadd.f32 %v438, %v594
        %596 = vmatmul.bf16.gmra.mxu0 %v408
        %v597 = vpop.f32.mrf.mxu0
        %v598 = vadd.f32 %v438, %v597
        %v599 = vpop.f32.mrf.mxu0
        %v600 = vadd.f32 %v438, %v599
        %601 = vmatmul.bf16.gmra.mxu0 %v409
        %v602 = vpop.f32.mrf.mxu0
        %v603 = vadd.f32 %v438, %v602
        %v604 = vpop.f32.mrf.mxu0
        %v605 = vadd.f32 %v438, %v604
        %606 = vmatmul.bf16.gmra.mxu0 %v410
        %v607 = vpop.f32.mrf.mxu0
        %v608 = vadd.f32 %v438, %v607
        %v609 = vpop.f32.mrf.mxu0
        %v610 = vadd.f32 %v438, %v609
        %611 = vmatmul.bf16.gmra.mxu0 %v411
        %v612 = vpop.f32.mrf.mxu0
        %v613 = vadd.f32 %v438, %v612
        %v614 = vpop.f32.mrf.mxu0
        %v615 = vadd.f32 %v438, %v614
        %616 = vmatmul.bf16.gmra.mxu0 %v412
        %v617 = vpop.f32.mrf.mxu0
        %v618 = vadd.f32 %v438, %v617
        %v619 = vpop.f32.mrf.mxu0
        %v620 = vadd.f32 %v438, %v619
        %621 = vmatmul.bf16.gmra.mxu0 %v413
        %v622 = vpop.f32.mrf.mxu0
        %v623 = vadd.f32 %v438, %v622
        %v624 = vpop.f32.mrf.mxu0
        %v625 = vadd.f32 %v438, %v624
        %626 = vmatmul.bf16.gmra.mxu0 %v414
        %v627 = vpop.f32.mrf.mxu0
        %v628 = vadd.f32 %v438, %v627
        %v629 = vpop.f32.mrf.mxu0
        %v630 = vadd.f32 %v438, %v629
        %631 = vmatmul.bf16.gmra.mxu0 %v415
        %v632 = vpop.f32.mrf.mxu0
        %v633 = vadd.f32 %v438, %v632
        %v634 = vpop.f32.mrf.mxu0
        %v635 = vadd.f32 %v438, %v634
        %636 = vmatmul.bf16.gmra.mxu0 %v416
        %v637 = vpop.f32.mrf.mxu0
        %v638 = vadd.f32 %v438, %v637
        %v639 = vpop.f32.mrf.mxu0
        %v640 = vadd.f32 %v438, %v639
        %641 = vmatmul.bf16.gmra.mxu0 %v417
        %v642 = vpop.f32.mrf.mxu0
        %v643 = vadd.f32 %v438, %v642
        %v644 = vpop.f32.mrf.mxu0
        %v645 = vadd.f32 %v438, %v644
        %646 = vmatmul.bf16.gmra.mxu0 %v418
        %v647 = vpop.f32.mrf.mxu0
        %v648 = vadd.f32 %v438, %v647
        %v649 = vpop.f32.mrf.mxu0
        %v650 = vadd.f32 %v438, %v649
        %651 = vmatmul.bf16.gmra.mxu0 %v419
        %v652 = vpop.f32.mrf.mxu0
        %v653 = vadd.f32 %v438, %v652
        %v654 = vpop.f32.mrf.mxu0
        %v655 = vadd.f32 %v438, %v654
        %656 = vdwg.mxu0
        %v657 = vsub.f32 0.0, %v498
        %v658 = vsub.f32 0.0, %v500
        %v659 = vsub.f32 0.0, %v503
        %v660 = vsub.f32 0.0, %v505
        %v661 = vsub.f32 0.0, %v508
        %v662 = vsub.f32 0.0, %v510
        %v663 = vsub.f32 0.0, %v513
        %v664 = vsub.f32 0.0, %v515
        %v665 = vsub.f32 0.0, %v518
        %v666 = vsub.f32 0.0, %v520
        %v667 = vsub.f32 0.0, %v523
        %v668 = vsub.f32 0.0, %v525
        %v669 = vsub.f32 0.0, %v528
        %v670 = vsub.f32 0.0, %v530
        %v671 = vsub.f32 0.0, %v533
        %v672 = vsub.f32 0.0, %v535
        %v673 = vsub.f32 0.0, %v538
        %v674 = vsub.f32 0.0, %v540
        %v675 = vsub.f32 0.0, %v543
        %v676 = vsub.f32 0.0, %v545
        %v677 = vsub.f32 0.0, %v548
        %v678 = vsub.f32 0.0, %v550
        %v679 = vsub.f32 0.0, %v553
        %v680 = vsub.f32 0.0, %v555
        %v681 = vsub.f32 0.0, %v558
        %v682 = vsub.f32 0.0, %v560
        %v683 = vsub.f32 0.0, %v563
        %v684 = vsub.f32 0.0, %v565
        %v685 = vsub.f32 0.0, %v568
        %v686 = vsub.f32 0.0, %v570
        %v687 = vsub.f32 0.0, %v573
        %v688 = vsub.f32 0.0, %v575
        %v689 = vsub.f32 0.0, %v578
        %v690 = vsub.f32 0.0, %v580
        %v691 = vsub.f32 0.0, %v583
        %v692 = vsub.f32 0.0, %v585
        %v693 = vsub.f32 0.0, %v588
        %v694 = vsub.f32 0.0, %v590
        %v695 = vsub.f32 0.0, %v593
        %v696 = vsub.f32 0.0, %v595
        %v697 = vsub.f32 0.0, %v598
        %v698 = vsub.f32 0.0, %v600
        %v699 = vsub.f32 0.0, %v603
        %v700 = vsub.f32 0.0, %v605
        %v701 = vsub.f32 0.0, %v608
        %v702 = vsub.f32 0.0, %v610
        %v703 = vsub.f32 0.0, %v613
        %v704 = vsub.f32 0.0, %v615
        %v705 = vsub.f32 0.0, %v618
        %v706 = vsub.f32 0.0, %v620
        %v707 = vsub.f32 0.0, %v623
        %v708 = vsub.f32 0.0, %v625
        %v709 = vsub.f32 0.0, %v628
        %v710 = vsub.f32 0.0, %v630
        %v711 = vsub.f32 0.0, %v633
        %v712 = vsub.f32 0.0, %v635
        %v713 = vsub.f32 0.0, %v638
        %v714 = vsub.f32 0.0, %v640
        %v715 = vsub.f32 0.0, %v643
        %v716 = vsub.f32 0.0, %v645
        %v717 = vsub.f32 0.0, %v648
        %v718 = vsub.f32 0.0, %v650
        %v719 = vsub.f32 0.0, %v653
        %v720 = vsub.f32 0.0, %v655
        %v721 = vmul.f32 %v657, 1.442695
        %v722 = vpow.pop %v721
        %v723 = vmul.f32 %v658, 1.442695
        %v724 = vpow.pop %v723
        %v725 = vmul.f32 %v659, 1.442695
        %v726 = vpow.pop %v725
        %v727 = vmul.f32 %v660, 1.442695
        %v728 = vpow.pop %v727
        %v729 = vmul.f32 %v661, 1.442695
        %v730 = vpow.pop %v729
        %v731 = vmul.f32 %v662, 1.442695
        %v732 = vpow.pop %v731
        %v733 = vmul.f32 %v663, 1.442695
        %v734 = vpow.pop %v733
        %v735 = vmul.f32 %v664, 1.442695
        %v736 = vpow.pop %v735
        %v737 = vmul.f32 %v665, 1.442695
        %v738 = vpow.pop %v737
        %v739 = vmul.f32 %v666, 1.442695
        %v740 = vpow.pop %v739
        %v741 = vmul.f32 %v667, 1.442695
        %v742 = vpow.pop %v741
        %v743 = vmul.f32 %v668, 1.442695
        %v744 = vpow.pop %v743
        %v745 = vmul.f32 %v669, 1.442695
        %v746 = vpow.pop %v745
        %v747 = vmul.f32 %v670, 1.442695
        %v748 = vpow.pop %v747
        %v749 = vmul.f32 %v671, 1.442695
        %v750 = vpow.pop %v749
        %v751 = vmul.f32 %v672, 1.442695
        %v752 = vpow.pop %v751
        %v753 = vmul.f32 %v673, 1.442695
        %v754 = vpow.pop %v753
        %v755 = vmul.f32 %v674, 1.442695
        %v756 = vpow.pop %v755
        %v757 = vmul.f32 %v675, 1.442695
        %v758 = vpow.pop %v757
        %v759 = vmul.f32 %v676, 1.442695
        %v760 = vpow.pop %v759
        %v761 = vmul.f32 %v677, 1.442695
        %v762 = vpow.pop %v761
        %v763 = vmul.f32 %v678, 1.442695
        %v764 = vpow.pop %v763
        %v765 = vmul.f32 %v679, 1.442695
        %v766 = vpow.pop %v765
        %v767 = vmul.f32 %v680, 1.442695
        %v768 = vpow.pop %v767
        %v769 = vmul.f32 %v681, 1.442695
        %v770 = vpow.pop %v769
        %v771 = vmul.f32 %v682, 1.442695
        %v772 = vpow.pop %v771
        %v773 = vmul.f32 %v683, 1.442695
        %v774 = vpow.pop %v773
        %v775 = vmul.f32 %v684, 1.442695
        %v776 = vpow.pop %v775
        %v777 = vmul.f32 %v685, 1.442695
        %v778 = vpow.pop %v777
        %v779 = vmul.f32 %v686, 1.442695
        %v780 = vpow.pop %v779
        %v781 = vmul.f32 %v687, 1.442695
        %v782 = vpow.pop %v781
        %v783 = vmul.f32 %v688, 1.442695
        %v784 = vpow.pop %v783
        %v785 = vmul.f32 %v689, 1.442695
        %v786 = vpow.pop %v785
        %v787 = vmul.f32 %v690, 1.442695
        %v788 = vpow.pop %v787
        %v789 = vmul.f32 %v691, 1.442695
        %v790 = vpow.pop %v789
        %v791 = vmul.f32 %v692, 1.442695
        %v792 = vpow.pop %v791
        %v793 = vmul.f32 %v693, 1.442695
        %v794 = vpow.pop %v793
        %v795 = vmul.f32 %v694, 1.442695
        %v796 = vpow.pop %v795
        %v797 = vmul.f32 %v695, 1.442695
        %v798 = vpow.pop %v797
        %v799 = vmul.f32 %v696, 1.442695
        %v800 = vpow.pop %v799
        %v801 = vmul.f32 %v697, 1.442695
        %v802 = vpow.pop %v801
        %v803 = vmul.f32 %v698, 1.442695
        %v804 = vpow.pop %v803
        %v805 = vmul.f32 %v699, 1.442695
        %v806 = vpow.pop %v805
        %v807 = vmul.f32 %v700, 1.442695
        %v808 = vpow.pop %v807
        %v809 = vmul.f32 %v701, 1.442695
        %v810 = vpow.pop %v809
        %v811 = vmul.f32 %v702, 1.442695
        %v812 = vpow.pop %v811
        %v813 = vmul.f32 %v703, 1.442695
        %v814 = vpow.pop %v813
        %v815 = vmul.f32 %v704, 1.442695
        %v816 = vpow.pop %v815
        %v817 = vmul.f32 %v705, 1.442695
        %v818 = vpow.pop %v817
        %v819 = vmul.f32 %v706, 1.442695
        %v820 = vpow.pop %v819
        %v821 = vmul.f32 %v707, 1.442695
        %v822 = vpow.pop %v821
        %v823 = vmul.f32 %v708, 1.442695
        %v824 = vpow.pop %v823
        %v825 = vmul.f32 %v709, 1.442695
        %v826 = vpow.pop %v825
        %v827 = vmul.f32 %v710, 1.442695
        %v828 = vpow.pop %v827
        %v829 = vmul.f32 %v711, 1.442695
        %v830 = vpow.pop %v829
        %v831 = vmul.f32 %v712, 1.442695
        %v832 = vpow.pop %v831
        %v833 = vmul.f32 %v713, 1.442695
        %v834 = vpow.pop %v833
        %v835 = vmul.f32 %v714, 1.442695
        %v836 = vpow.pop %v835
        %v837 = vmul.f32 %v715, 1.442695
        %v838 = vpow.pop %v837
        %v839 = vmul.f32 %v716, 1.442695
        %v840 = vpow.pop %v839
        %v841 = vmul.f32 %v717, 1.442695
        %v842 = vpow.pop %v841
        %v843 = vmul.f32 %v718, 1.442695
        %v844 = vpow.pop %v843
        %v845 = vmul.f32 %v719, 1.442695
        %v846 = vpow.pop %v845
        %v847 = vmul.f32 %v720, 1.442695
        %v848 = vpow.pop %v847
        %v849 = vadd.f32 %v722, 1.0
        %v850 = vadd.f32 %v724, 1.0
        %v851 = vadd.f32 %v726, 1.0
        %v852 = vadd.f32 %v728, 1.0
        %v853 = vadd.f32 %v730, 1.0
        %v854 = vadd.f32 %v732, 1.0
        %v855 = vadd.f32 %v734, 1.0
        %v856 = vadd.f32 %v736, 1.0
        %v857 = vadd.f32 %v738, 1.0
        %v858 = vadd.f32 %v740, 1.0
        %v859 = vadd.f32 %v742, 1.0
        %v860 = vadd.f32 %v744, 1.0
        %v861 = vadd.f32 %v746, 1.0
        %v862 = vadd.f32 %v748, 1.0
        %v863 = vadd.f32 %v750, 1.0
        %v864 = vadd.f32 %v752, 1.0
        %v865 = vadd.f32 %v754, 1.0
        %v866 = vadd.f32 %v756, 1.0
        %v867 = vadd.f32 %v758, 1.0
        %v868 = vadd.f32 %v760, 1.0
        %v869 = vadd.f32 %v762, 1.0
        %v870 = vadd.f32 %v764, 1.0
        %v871 = vadd.f32 %v766, 1.0
        %v872 = vadd.f32 %v768, 1.0
        %v873 = vadd.f32 %v770, 1.0
        %v874 = vadd.f32 %v772, 1.0
        %v875 = vadd.f32 %v774, 1.0
        %v876 = vadd.f32 %v776, 1.0
        %v877 = vadd.f32 %v778, 1.0
        %v878 = vadd.f32 %v780, 1.0
        %v879 = vadd.f32 %v782, 1.0
        %v880 = vadd.f32 %v784, 1.0
        %v881 = vadd.f32 %v786, 1.0
        %v882 = vadd.f32 %v788, 1.0
        %v883 = vadd.f32 %v790, 1.0
        %v884 = vadd.f32 %v792, 1.0
        %v885 = vadd.f32 %v794, 1.0
        %v886 = vadd.f32 %v796, 1.0
        %v887 = vadd.f32 %v798, 1.0
        %v888 = vadd.f32 %v800, 1.0
        %v889 = vadd.f32 %v802, 1.0
        %v890 = vadd.f32 %v804, 1.0
        %v891 = vadd.f32 %v806, 1.0
        %v892 = vadd.f32 %v808, 1.0
        %v893 = vadd.f32 %v810, 1.0
        %v894 = vadd.f32 %v812, 1.0
        %v895 = vadd.f32 %v814, 1.0
        %v896 = vadd.f32 %v816, 1.0
        %v897 = vadd.f32 %v818, 1.0
        %v898 = vadd.f32 %v820, 1.0
        %v899 = vadd.f32 %v822, 1.0
        %v900 = vadd.f32 %v824, 1.0
        %v901 = vadd.f32 %v826, 1.0
        %v902 = vadd.f32 %v828, 1.0
        %v903 = vadd.f32 %v830, 1.0
        %v904 = vadd.f32 %v832, 1.0
        %v905 = vadd.f32 %v834, 1.0
        %v906 = vadd.f32 %v836, 1.0
        %v907 = vadd.f32 %v838, 1.0
        %v908 = vadd.f32 %v840, 1.0
        %v909 = vadd.f32 %v842, 1.0
        %v910 = vadd.f32 %v844, 1.0
        %v911 = vadd.f32 %v846, 1.0
        %v912 = vadd.f32 %v848, 1.0
        %v913 = vrcp.pop %v849
        %v914 = vrcp.pop %v850
        %v915 = vrcp.pop %v851
        %v916 = vrcp.pop %v852
        %v917 = vrcp.pop %v853
        %v918 = vrcp.pop %v854
        %v919 = vrcp.pop %v855
        %v920 = vrcp.pop %v856
        %v921 = vrcp.pop %v857
        %v922 = vrcp.pop %v858
        %v923 = vrcp.pop %v859
        %v924 = vrcp.pop %v860
        %v925 = vrcp.pop %v861
        %v926 = vrcp.pop %v862
        %v927 = vrcp.pop %v863
        %v928 = vrcp.pop %v864
        %v929 = vrcp.pop %v865
        %v930 = vrcp.pop %v866
        %v931 = vrcp.pop %v867
        %v932 = vrcp.pop %v868
        %v933 = vrcp.pop %v869
        %v934 = vrcp.pop %v870
        %v935 = vrcp.pop %v871
        %v936 = vrcp.pop %v872
        %v937 = vrcp.pop %v873
        %v938 = vrcp.pop %v874
        %v939 = vrcp.pop %v875
        %v940 = vrcp.pop %v876
        %v941 = vrcp.pop %v877
        %v942 = vrcp.pop %v878
        %v943 = vrcp.pop %v879
        %v944 = vrcp.pop %v880
        %v945 = vrcp.pop %v881
        %v946 = vrcp.pop %v882
        %v947 = vrcp.pop %v883
        %v948 = vrcp.pop %v884
        %v949 = vrcp.pop %v885
        %v950 = vrcp.pop %v886
        %v951 = vrcp.pop %v887
        %v952 = vrcp.pop %v888
        %v953 = vrcp.pop %v889
        %v954 = vrcp.pop %v890
        %v955 = vrcp.pop %v891
        %v956 = vrcp.pop %v892
        %v957 = vrcp.pop %v893
        %v958 = vrcp.pop %v894
        %v959 = vrcp.pop %v895
        %v960 = vrcp.pop %v896
        %v961 = vrcp.pop %v897
        %v962 = vrcp.pop %v898
        %v963 = vrcp.pop %v899
        %v964 = vrcp.pop %v900
        %v965 = vrcp.pop %v901
        %v966 = vrcp.pop %v902
        %v967 = vrcp.pop %v903
        %v968 = vrcp.pop %v904
        %v969 = vrcp.pop %v905
        %v970 = vrcp.pop %v906
        %v971 = vrcp.pop %v907
        %v972 = vrcp.pop %v908
        %v973 = vrcp.pop %v909
        %v974 = vrcp.pop %v910
        %v975 = vrcp.pop %v911
        %v976 = vrcp.pop %v912
        %v977 = vmul.f32 %v498, %v913
        %v978 = vmul.f32 %v500, %v914
        %v979 = vmul.f32 %v503, %v915
        %v980 = vmul.f32 %v505, %v916
        %v981 = vmul.f32 %v508, %v917
        %v982 = vmul.f32 %v510, %v918
        %v983 = vmul.f32 %v513, %v919
        %v984 = vmul.f32 %v515, %v920
        %v985 = vmul.f32 %v518, %v921
        %v986 = vmul.f32 %v520, %v922
        %v987 = vmul.f32 %v523, %v923
        %v988 = vmul.f32 %v525, %v924
        %v989 = vmul.f32 %v528, %v925
        %v990 = vmul.f32 %v530, %v926
        %v991 = vmul.f32 %v533, %v927
        %v992 = vmul.f32 %v535, %v928
        %v993 = vmul.f32 %v538, %v929
        %v994 = vmul.f32 %v540, %v930
        %v995 = vmul.f32 %v543, %v931
        %v996 = vmul.f32 %v545, %v932
        %v997 = vmul.f32 %v548, %v933
        %v998 = vmul.f32 %v550, %v934
        %v999 = vmul.f32 %v553, %v935
        %v1000 = vmul.f32 %v555, %v936
        %v1001 = vmul.f32 %v558, %v937
        %v1002 = vmul.f32 %v560, %v938
        %v1003 = vmul.f32 %v563, %v939
        %v1004 = vmul.f32 %v565, %v940
        %v1005 = vmul.f32 %v568, %v941
        %v1006 = vmul.f32 %v570, %v942
        %v1007 = vmul.f32 %v573, %v943
        %v1008 = vmul.f32 %v575, %v944
        %v1009 = vmul.f32 %v578, %v945
        %v1010 = vmul.f32 %v580, %v946
        %v1011 = vmul.f32 %v583, %v947
        %v1012 = vmul.f32 %v585, %v948
        %v1013 = vmul.f32 %v588, %v949
        %v1014 = vmul.f32 %v590, %v950
        %v1015 = vmul.f32 %v593, %v951
        %v1016 = vmul.f32 %v595, %v952
        %v1017 = vmul.f32 %v598, %v953
        %v1018 = vmul.f32 %v600, %v954
        %v1019 = vmul.f32 %v603, %v955
        %v1020 = vmul.f32 %v605, %v956
        %v1021 = vmul.f32 %v608, %v957
        %v1022 = vmul.f32 %v610, %v958
        %v1023 = vmul.f32 %v613, %v959
        %v1024 = vmul.f32 %v615, %v960
        %v1025 = vmul.f32 %v618, %v961
        %v1026 = vmul.f32 %v620, %v962
        %v1027 = vmul.f32 %v623, %v963
        %v1028 = vmul.f32 %v625, %v964
        %v1029 = vmul.f32 %v628, %v965
        %v1030 = vmul.f32 %v630, %v966
        %v1031 = vmul.f32 %v633, %v967
        %v1032 = vmul.f32 %v635, %v968
        %v1033 = vmul.f32 %v638, %v969
        %v1034 = vmul.f32 %v640, %v970
        %v1035 = vmul.f32 %v643, %v971
        %v1036 = vmul.f32 %v645, %v972
        %v1037 = vmul.f32 %v648, %v973
        %v1038 = vmul.f32 %v650, %v974
        %v1039 = vmul.f32 %v653, %v975
        %v1040 = vmul.f32 %v655, %v976
        %v1041 = vpack.c.bf16 %v978, %v977
        %v1042 = vpack.c.bf16 %v980, %v979
        %v1043 = vpack.c.bf16 %v982, %v981
        %v1044 = vpack.c.bf16 %v984, %v983
        %v1045 = vpack.c.bf16 %v986, %v985
        %v1046 = vpack.c.bf16 %v988, %v987
        %v1047 = vpack.c.bf16 %v990, %v989
        %v1048 = vpack.c.bf16 %v992, %v991
        %v1049 = vpack.c.bf16 %v994, %v993
        %v1050 = vpack.c.bf16 %v996, %v995
        %v1051 = vpack.c.bf16 %v998, %v997
        %v1052 = vpack.c.bf16 %v1000, %v999
        %v1053 = vpack.c.bf16 %v1002, %v1001
        %v1054 = vpack.c.bf16 %v1004, %v1003
        %v1055 = vpack.c.bf16 %v1006, %v1005
        %v1056 = vpack.c.bf16 %v1008, %v1007
        %v1057 = vpack.c.bf16 %v1010, %v1009
        %v1058 = vpack.c.bf16 %v1012, %v1011
        %v1059 = vpack.c.bf16 %v1014, %v1013
        %v1060 = vpack.c.bf16 %v1016, %v1015
        %v1061 = vpack.c.bf16 %v1018, %v1017
        %v1062 = vpack.c.bf16 %v1020, %v1019
        %v1063 = vpack.c.bf16 %v1022, %v1021
        %v1064 = vpack.c.bf16 %v1024, %v1023
        %v1065 = vpack.c.bf16 %v1026, %v1025
        %v1066 = vpack.c.bf16 %v1028, %v1027
        %v1067 = vpack.c.bf16 %v1030, %v1029
        %v1068 = vpack.c.bf16 %v1032, %v1031
        %v1069 = vpack.c.bf16 %v1034, %v1033
        %v1070 = vpack.c.bf16 %v1036, %v1035
        %v1071 = vpack.c.bf16 %v1038, %v1037
        %v1072 = vpack.c.bf16 %v1040, %v1039
        %v1073 = vld [vmem:[#allocation8] sm:$0xf]
        %v1074 = vld [vmem:[#allocation8 + $0x4] sm:$0xf]
        %v1075 = vld [vmem:[#allocation8 + $0x8] sm:$0xf]
        %v1076 = vld [vmem:[#allocation8 + $0xc] sm:$0xf]
        %v1077 = vld [vmem:[#allocation8 + $0x10] sm:$0xf]
        %v1078 = vld [vmem:[#allocation8 + $0x14] sm:$0xf]
        %v1079 = vld [vmem:[#allocation8 + $0x18] sm:$0xf]
        %v1080 = vld [vmem:[#allocation8 + $0x1c] sm:$0xf]
        %v1081 = vld [vmem:[#allocation8 + $0x20] sm:$0xf]
        %v1082 = vld [vmem:[#allocation8 + $0x24] sm:$0xf]
        %v1083 = vld [vmem:[#allocation8 + $0x28] sm:$0xf]
        %v1084 = vld [vmem:[#allocation8 + $0x2c] sm:$0xf]
        %v1085 = vld [vmem:[#allocation8 + $0x30] sm:$0xf]
        %v1086 = vld [vmem:[#allocation8 + $0x34] sm:$0xf]
        %v1087 = vld [vmem:[#allocation8 + $0x38] sm:$0xf]
        %v1088 = vld [vmem:[#allocation8 + $0x3c] sm:$0xf]
        %v1089 = vld [vmem:[#allocation10] sm:$0x1]
        %v1091 = vperm.slane %v1089, 0
        %v1109 = vunpack.c.l.b16 %v1073
        %v1110 = vunpack.c.l.b16 %v1074
        %v1111 = vunpack.c.l.b16 %v1075
        %v1112 = vunpack.c.l.b16 %v1076
        %v1113 = vunpack.c.l.b16 %v1077
        %v1114 = vunpack.c.l.b16 %v1078
        %v1115 = vunpack.c.l.b16 %v1079
        %v1116 = vunpack.c.l.b16 %v1080
        %v1117 = vunpack.c.l.b16 %v1081
        %v1118 = vunpack.c.l.b16 %v1082
        %v1119 = vunpack.c.l.b16 %v1083
        %v1120 = vunpack.c.l.b16 %v1084
        %v1121 = vunpack.c.l.b16 %v1085
        %v1122 = vunpack.c.l.b16 %v1086
        %v1123 = vunpack.c.l.b16 %v1087
        %v1124 = vunpack.c.l.b16 %v1088
        %v1125 = vpack.c.b16 %v1110, %v1109
        %v1126 = vpack.c.b16 %v1112, %v1111
        %v1127 = vpack.c.b16 %v1114, %v1113
        %v1128 = vpack.c.b16 %v1116, %v1115
        %v1129 = vpack.c.b16 %v1118, %v1117
        %v1130 = vpack.c.b16 %v1120, %v1119
        %v1131 = vpack.c.b16 %v1122, %v1121
        %v1132 = vpack.c.b16 %v1124, %v1123
        %1141 = vmatpush.bf16.msra.mxu0 %v1132
        %1142 = vmatpush.bf16.msra.mxu0 %v1131
        %1143 = vmatpush.bf16.msra.mxu0 %v1130
        %1144 = vmatpush.bf16.msra.mxu0 %v1129
        %1145 = vmatpush.bf16.msra.mxu0 %v1128
        %1146 = vmatpush.bf16.msra.mxu0 %v1127
        %1147 = vmatpush.bf16.msra.mxu0 %v1126
        %1148 = vmatpush.bf16.msra.mxu0 %v1125
        %1149 = vmatmul.bf16.gmra.mxu0 %v1041
        %v1150 = vpop.f32.mrf.mxu0
        %v1151 = vadd.f32 %v1091, %v1150
        %v1152 = vpop.f32.mrf.mxu0
        %v1153 = vadd.f32 %v1091, %v1152
        %1154 = vmatmul.bf16.gmra.mxu0 %v1042
        %v1155 = vpop.f32.mrf.mxu0
        %v1156 = vadd.f32 %v1091, %v1155
        %v1157 = vpop.f32.mrf.mxu0
        %v1158 = vadd.f32 %v1091, %v1157
        %1159 = vmatmul.bf16.gmra.mxu0 %v1043
        %v1160 = vpop.f32.mrf.mxu0
        %v1161 = vadd.f32 %v1091, %v1160
        %v1162 = vpop.f32.mrf.mxu0
        %v1163 = vadd.f32 %v1091, %v1162
        %1164 = vmatmul.bf16.gmra.mxu0 %v1044
        %v1165 = vpop.f32.mrf.mxu0
        %v1166 = vadd.f32 %v1091, %v1165
        %v1167 = vpop.f32.mrf.mxu0
        %v1168 = vadd.f32 %v1091, %v1167
        %1169 = vmatmul.bf16.gmra.mxu0 %v1045
        %v1170 = vpop.f32.mrf.mxu0
        %v1171 = vadd.f32 %v1091, %v1170
        %v1172 = vpop.f32.mrf.mxu0
        %v1173 = vadd.f32 %v1091, %v1172
        %1174 = vmatmul.bf16.gmra.mxu0 %v1046
        %v1175 = vpop.f32.mrf.mxu0
        %v1176 = vadd.f32 %v1091, %v1175
        %v1177 = vpop.f32.mrf.mxu0
        %v1178 = vadd.f32 %v1091, %v1177
        %1179 = vmatmul.bf16.gmra.mxu0 %v1047
        %v1180 = vpop.f32.mrf.mxu0
        %v1181 = vadd.f32 %v1091, %v1180
        %v1182 = vpop.f32.mrf.mxu0
        %v1183 = vadd.f32 %v1091, %v1182
        %1184 = vmatmul.bf16.gmra.mxu0 %v1048
        %v1185 = vpop.f32.mrf.mxu0
        %v1186 = vadd.f32 %v1091, %v1185
        %v1187 = vpop.f32.mrf.mxu0
        %v1188 = vadd.f32 %v1091, %v1187
        %1189 = vmatmul.bf16.gmra.mxu0 %v1049
        %v1190 = vpop.f32.mrf.mxu0
        %v1191 = vadd.f32 %v1091, %v1190
        %v1192 = vpop.f32.mrf.mxu0
        %v1193 = vadd.f32 %v1091, %v1192
        %1194 = vmatmul.bf16.gmra.mxu0 %v1050
        %v1195 = vpop.f32.mrf.mxu0
        %v1196 = vadd.f32 %v1091, %v1195
        %v1197 = vpop.f32.mrf.mxu0
        %v1198 = vadd.f32 %v1091, %v1197
        %1199 = vmatmul.bf16.gmra.mxu0 %v1051
        %v1200 = vpop.f32.mrf.mxu0
        %v1201 = vadd.f32 %v1091, %v1200
        %v1202 = vpop.f32.mrf.mxu0
        %v1203 = vadd.f32 %v1091, %v1202
        %1204 = vmatmul.bf16.gmra.mxu0 %v1052
        %v1205 = vpop.f32.mrf.mxu0
        %v1206 = vadd.f32 %v1091, %v1205
        %v1207 = vpop.f32.mrf.mxu0
        %v1208 = vadd.f32 %v1091, %v1207
        %1209 = vmatmul.bf16.gmra.mxu0 %v1053
        %v1210 = vpop.f32.mrf.mxu0
        %v1211 = vadd.f32 %v1091, %v1210
        %v1212 = vpop.f32.mrf.mxu0
        %v1213 = vadd.f32 %v1091, %v1212
        %1214 = vmatmul.bf16.gmra.mxu0 %v1054
        %v1215 = vpop.f32.mrf.mxu0
        %v1216 = vadd.f32 %v1091, %v1215
        %v1217 = vpop.f32.mrf.mxu0
        %v1218 = vadd.f32 %v1091, %v1217
        %1219 = vmatmul.bf16.gmra.mxu0 %v1055
        %v1220 = vpop.f32.mrf.mxu0
        %v1221 = vadd.f32 %v1091, %v1220
        %v1222 = vpop.f32.mrf.mxu0
        %v1223 = vadd.f32 %v1091, %v1222
        %1224 = vmatmul.bf16.gmra.mxu0 %v1056
        %v1225 = vpop.f32.mrf.mxu0
        %v1226 = vadd.f32 %v1091, %v1225
        %v1227 = vpop.f32.mrf.mxu0
        %v1228 = vadd.f32 %v1091, %v1227
        %1229 = vmatmul.bf16.gmra.mxu0 %v1057
        %v1230 = vpop.f32.mrf.mxu0
        %v1231 = vadd.f32 %v1091, %v1230
        %v1232 = vpop.f32.mrf.mxu0
        %v1233 = vadd.f32 %v1091, %v1232
        %1234 = vmatmul.bf16.gmra.mxu0 %v1058
        %v1235 = vpop.f32.mrf.mxu0
        %v1236 = vadd.f32 %v1091, %v1235
        %v1237 = vpop.f32.mrf.mxu0
        %v1238 = vadd.f32 %v1091, %v1237
        %1239 = vmatmul.bf16.gmra.mxu0 %v1059
        %v1240 = vpop.f32.mrf.mxu0
        %v1241 = vadd.f32 %v1091, %v1240
        %v1242 = vpop.f32.mrf.mxu0
        %v1243 = vadd.f32 %v1091, %v1242
        %1244 = vmatmul.bf16.gmra.mxu0 %v1060
        %v1245 = vpop.f32.mrf.mxu0
        %v1246 = vadd.f32 %v1091, %v1245
        %v1247 = vpop.f32.mrf.mxu0
        %v1248 = vadd.f32 %v1091, %v1247
        %1249 = vmatmul.bf16.gmra.mxu0 %v1061
        %v1250 = vpop.f32.mrf.mxu0
        %v1251 = vadd.f32 %v1091, %v1250
        %v1252 = vpop.f32.mrf.mxu0
        %v1253 = vadd.f32 %v1091, %v1252
        %1254 = vmatmul.bf16.gmra.mxu0 %v1062
        %v1255 = vpop.f32.mrf.mxu0
        %v1256 = vadd.f32 %v1091, %v1255
        %v1257 = vpop.f32.mrf.mxu0
        %v1258 = vadd.f32 %v1091, %v1257
        %1259 = vmatmul.bf16.gmra.mxu0 %v1063
        %v1260 = vpop.f32.mrf.mxu0
        %v1261 = vadd.f32 %v1091, %v1260
        %v1262 = vpop.f32.mrf.mxu0
        %v1263 = vadd.f32 %v1091, %v1262
        %1264 = vmatmul.bf16.gmra.mxu0 %v1064
        %v1265 = vpop.f32.mrf.mxu0
        %v1266 = vadd.f32 %v1091, %v1265
        %v1267 = vpop.f32.mrf.mxu0
        %v1268 = vadd.f32 %v1091, %v1267
        %1269 = vmatmul.bf16.gmra.mxu0 %v1065
        %v1270 = vpop.f32.mrf.mxu0
        %v1271 = vadd.f32 %v1091, %v1270
        %v1272 = vpop.f32.mrf.mxu0
        %v1273 = vadd.f32 %v1091, %v1272
        %1274 = vmatmul.bf16.gmra.mxu0 %v1066
        %v1275 = vpop.f32.mrf.mxu0
        %v1276 = vadd.f32 %v1091, %v1275
        %v1277 = vpop.f32.mrf.mxu0
        %v1278 = vadd.f32 %v1091, %v1277
        %1279 = vmatmul.bf16.gmra.mxu0 %v1067
        %v1280 = vpop.f32.mrf.mxu0
        %v1281 = vadd.f32 %v1091, %v1280
        %v1282 = vpop.f32.mrf.mxu0
        %v1283 = vadd.f32 %v1091, %v1282
        %1284 = vmatmul.bf16.gmra.mxu0 %v1068
        %v1285 = vpop.f32.mrf.mxu0
        %v1286 = vadd.f32 %v1091, %v1285
        %v1287 = vpop.f32.mrf.mxu0
        %v1288 = vadd.f32 %v1091, %v1287
        %1289 = vmatmul.bf16.gmra.mxu0 %v1069
        %v1290 = vpop.f32.mrf.mxu0
        %v1291 = vadd.f32 %v1091, %v1290
        %v1292 = vpop.f32.mrf.mxu0
        %v1293 = vadd.f32 %v1091, %v1292
        %1294 = vmatmul.bf16.gmra.mxu0 %v1070
        %v1295 = vpop.f32.mrf.mxu0
        %v1296 = vadd.f32 %v1091, %v1295
        %v1297 = vpop.f32.mrf.mxu0
        %v1298 = vadd.f32 %v1091, %v1297
        %1299 = vmatmul.bf16.gmra.mxu0 %v1071
        %v1300 = vpop.f32.mrf.mxu0
        %v1301 = vadd.f32 %v1091, %v1300
        %v1302 = vpop.f32.mrf.mxu0
        %v1303 = vadd.f32 %v1091, %v1302
        %1304 = vmatmul.bf16.gmra.mxu0 %v1072
        %v1305 = vpop.f32.mrf.mxu0
        %v1306 = vadd.f32 %v1091, %v1305
        %v1307 = vpop.f32.mrf.mxu0
        %v1308 = vadd.f32 %v1091, %v1307
        %1309 = vdwg.mxu0
        %v1310 = vadd.f32 %v324, %v1151
        %v1311 = vadd.f32 %v325, %v1153
        %v1312 = vadd.f32 %v326, %v1156
        %v1313 = vadd.f32 %v327, %v1158
        %v1314 = vadd.f32 %v328, %v1161
        %v1315 = vadd.f32 %v329, %v1163
        %v1316 = vadd.f32 %v330, %v1166
        %v1317 = vadd.f32 %v331, %v1168
        %v1318 = vadd.f32 %v332, %v1171
        %v1319 = vadd.f32 %v333, %v1173
        %v1320 = vadd.f32 %v334, %v1176
        %v1321 = vadd.f32 %v335, %v1178
        %v1322 = vadd.f32 %v336, %v1181
        %v1323 = vadd.f32 %v337, %v1183
        %v1324 = vadd.f32 %v338, %v1186
        %v1325 = vadd.f32 %v339, %v1188
        %v1326 = vadd.f32 %v340, %v1191
        %v1327 = vadd.f32 %v341, %v1193
        %v1328 = vadd.f32 %v342, %v1196
        %v1329 = vadd.f32 %v343, %v1198
        %v1330 = vadd.f32 %v344, %v1201
        %v1331 = vadd.f32 %v345, %v1203
        %v1332 = vadd.f32 %v346, %v1206
        %v1333 = vadd.f32 %v347, %v1208
        %v1334 = vadd.f32 %v348, %v1211
        %v1335 = vadd.f32 %v349, %v1213
        %v1336 = vadd.f32 %v350, %v1216
        %v1337 = vadd.f32 %v351, %v1218
        %v1338 = vadd.f32 %v352, %v1221
        %v1339 = vadd.f32 %v353, %v1223
        %v1340 = vadd.f32 %v354, %v1226
        %v1341 = vadd.f32 %v355, %v1228
        %v1342 = vadd.f32 %v356, %v1231
        %v1343 = vadd.f32 %v357, %v1233
        %v1344 = vadd.f32 %v358, %v1236
        %v1345 = vadd.f32 %v359, %v1238
        %v1346 = vadd.f32 %v360, %v1241
        %v1347 = vadd.f32 %v361, %v1243
        %v1348 = vadd.f32 %v362, %v1246
        %v1349 = vadd.f32 %v363, %v1248
        %v1350 = vadd.f32 %v364, %v1251
        %v1351 = vadd.f32 %v365, %v1253
        %v1352 = vadd.f32 %v366, %v1256
        %v1353 = vadd.f32 %v367, %v1258
        %v1354 = vadd.f32 %v368, %v1261
        %v1355 = vadd.f32 %v369, %v1263
        %v1356 = vadd.f32 %v370, %v1266
        %v1357 = vadd.f32 %v371, %v1268
        %v1358 = vadd.f32 %v372, %v1271
        %v1359 = vadd.f32 %v373, %v1273
        %v1360 = vadd.f32 %v374, %v1276
        %v1361 = vadd.f32 %v375, %v1278
        %v1362 = vadd.f32 %v376, %v1281
        %v1363 = vadd.f32 %v377, %v1283
        %v1364 = vadd.f32 %v378, %v1286
        %v1365 = vadd.f32 %v379, %v1288
        %v1366 = vadd.f32 %v380, %v1291
        %v1367 = vadd.f32 %v381, %v1293
        %v1368 = vadd.f32 %v382, %v1296
        %v1369 = vadd.f32 %v383, %v1298
        %v1370 = vadd.f32 %v384, %v1301
        %v1371 = vadd.f32 %v385, %v1303
        %v1372 = vadd.f32 %v386, %v1306
        %v1373 = vadd.f32 %v387, %v1308
        %v1374 = vsub.f32 0.0, %v1310
        %v1375 = vsub.f32 0.0, %v1311
        %v1376 = vsub.f32 0.0, %v1312
        %v1377 = vsub.f32 0.0, %v1313
        %v1378 = vsub.f32 0.0, %v1314
        %v1379 = vsub.f32 0.0, %v1315
        %v1380 = vsub.f32 0.0, %v1316
        %v1381 = vsub.f32 0.0, %v1317
        %v1382 = vsub.f32 0.0, %v1318
        %v1383 = vsub.f32 0.0, %v1319
        %v1384 = vsub.f32 0.0, %v1320
        %v1385 = vsub.f32 0.0, %v1321
        %v1386 = vsub.f32 0.0, %v1322
        %v1387 = vsub.f32 0.0, %v1323
        %v1388 = vsub.f32 0.0, %v1324
        %v1389 = vsub.f32 0.0, %v1325
        %v1390 = vsub.f32 0.0, %v1326
        %v1391 = vsub.f32 0.0, %v1327
        %v1392 = vsub.f32 0.0, %v1328
        %v1393 = vsub.f32 0.0, %v1329
        %v1394 = vsub.f32 0.0, %v1330
        %v1395 = vsub.f32 0.0, %v1331
        %v1396 = vsub.f32 0.0, %v1332
        %v1397 = vsub.f32 0.0, %v1333
        %v1398 = vsub.f32 0.0, %v1334
        %v1399 = vsub.f32 0.0, %v1335
        %v1400 = vsub.f32 0.0, %v1336
        %v1401 = vsub.f32 0.0, %v1337
        %v1402 = vsub.f32 0.0, %v1338
        %v1403 = vsub.f32 0.0, %v1339
        %v1404 = vsub.f32 0.0, %v1340
        %v1405 = vsub.f32 0.0, %v1341
        %v1406 = vsub.f32 0.0, %v1342
        %v1407 = vsub.f32 0.0, %v1343
        %v1408 = vsub.f32 0.0, %v1344
        %v1409 = vsub.f32 0.0, %v1345
        %v1410 = vsub.f32 0.0, %v1346
        %v1411 = vsub.f32 0.0, %v1347
        %v1412 = vsub.f32 0.0, %v1348
        %v1413 = vsub.f32 0.0, %v1349
        %v1414 = vsub.f32 0.0, %v1350
        %v1415 = vsub.f32 0.0, %v1351
        %v1416 = vsub.f32 0.0, %v1352
        %v1417 = vsub.f32 0.0, %v1353
        %v1418 = vsub.f32 0.0, %v1354
        %v1419 = vsub.f32 0.0, %v1355
        %v1420 = vsub.f32 0.0, %v1356
        %v1421 = vsub.f32 0.0, %v1357
        %v1422 = vsub.f32 0.0, %v1358
        %v1423 = vsub.f32 0.0, %v1359
        %v1424 = vsub.f32 0.0, %v1360
        %v1425 = vsub.f32 0.0, %v1361
        %v1426 = vsub.f32 0.0, %v1362
        %v1427 = vsub.f32 0.0, %v1363
        %v1428 = vsub.f32 0.0, %v1364
        %v1429 = vsub.f32 0.0, %v1365
        %v1430 = vsub.f32 0.0, %v1366
        %v1431 = vsub.f32 0.0, %v1367
        %v1432 = vsub.f32 0.0, %v1368
        %v1433 = vsub.f32 0.0, %v1369
        %v1434 = vsub.f32 0.0, %v1370
        %v1435 = vsub.f32 0.0, %v1371
        %v1436 = vsub.f32 0.0, %v1372
        %v1437 = vsub.f32 0.0, %v1373
        %v1438 = vmul.f32 %v1374, 1.442695
        %v1439 = vpow.pop %v1438
        %v1440 = vmul.f32 %v1375, 1.442695
        %v1441 = vpow.pop %v1440
        %v1442 = vmul.f32 %v1376, 1.442695
        %v1443 = vpow.pop %v1442
        %v1444 = vmul.f32 %v1377, 1.442695
        %v1445 = vpow.pop %v1444
        %v1446 = vmul.f32 %v1378, 1.442695
        %v1447 = vpow.pop %v1446
        %v1448 = vmul.f32 %v1379, 1.442695
        %v1449 = vpow.pop %v1448
        %v1450 = vmul.f32 %v1380, 1.442695
        %v1451 = vpow.pop %v1450
        %v1452 = vmul.f32 %v1381, 1.442695
        %v1453 = vpow.pop %v1452
        %v1454 = vmul.f32 %v1382, 1.442695
        %v1455 = vpow.pop %v1454
        %v1456 = vmul.f32 %v1383, 1.442695
        %v1457 = vpow.pop %v1456
        %v1458 = vmul.f32 %v1384, 1.442695
        %v1459 = vpow.pop %v1458
        %v1460 = vmul.f32 %v1385, 1.442695
        %v1461 = vpow.pop %v1460
        %v1462 = vmul.f32 %v1386, 1.442695
        %v1463 = vpow.pop %v1462
        %v1464 = vmul.f32 %v1387, 1.442695
        %v1465 = vpow.pop %v1464
        %v1466 = vmul.f32 %v1388, 1.442695
        %v1467 = vpow.pop %v1466
        %v1468 = vmul.f32 %v1389, 1.442695
        %v1469 = vpow.pop %v1468
        %v1470 = vmul.f32 %v1390, 1.442695
        %v1471 = vpow.pop %v1470
        %v1472 = vmul.f32 %v1391, 1.442695
        %v1473 = vpow.pop %v1472
        %v1474 = vmul.f32 %v1392, 1.442695
        %v1475 = vpow.pop %v1474
        %v1476 = vmul.f32 %v1393, 1.442695
        %v1477 = vpow.pop %v1476
        %v1478 = vmul.f32 %v1394, 1.442695
        %v1479 = vpow.pop %v1478
        %v1480 = vmul.f32 %v1395, 1.442695
        %v1481 = vpow.pop %v1480
        %v1482 = vmul.f32 %v1396, 1.442695
        %v1483 = vpow.pop %v1482
        %v1484 = vmul.f32 %v1397, 1.442695
        %v1485 = vpow.pop %v1484
        %v1486 = vmul.f32 %v1398, 1.442695
        %v1487 = vpow.pop %v1486
        %v1488 = vmul.f32 %v1399, 1.442695
        %v1489 = vpow.pop %v1488
        %v1490 = vmul.f32 %v1400, 1.442695
        %v1491 = vpow.pop %v1490
        %v1492 = vmul.f32 %v1401, 1.442695
        %v1493 = vpow.pop %v1492
        %v1494 = vmul.f32 %v1402, 1.442695
        %v1495 = vpow.pop %v1494
        %v1496 = vmul.f32 %v1403, 1.442695
        %v1497 = vpow.pop %v1496
        %v1498 = vmul.f32 %v1404, 1.442695
        %v1499 = vpow.pop %v1498
        %v1500 = vmul.f32 %v1405, 1.442695
        %v1501 = vpow.pop %v1500
        %v1502 = vmul.f32 %v1406, 1.442695
        %v1503 = vpow.pop %v1502
        %v1504 = vmul.f32 %v1407, 1.442695
        %v1505 = vpow.pop %v1504
        %v1506 = vmul.f32 %v1408, 1.442695
        %v1507 = vpow.pop %v1506
        %v1508 = vmul.f32 %v1409, 1.442695
        %v1509 = vpow.pop %v1508
        %v1510 = vmul.f32 %v1410, 1.442695
        %v1511 = vpow.pop %v1510
        %v1512 = vmul.f32 %v1411, 1.442695
        %v1513 = vpow.pop %v1512
        %v1514 = vmul.f32 %v1412, 1.442695
        %v1515 = vpow.pop %v1514
        %v1516 = vmul.f32 %v1413, 1.442695
        %v1517 = vpow.pop %v1516
        %v1518 = vmul.f32 %v1414, 1.442695
        %v1519 = vpow.pop %v1518
        %v1520 = vmul.f32 %v1415, 1.442695
        %v1521 = vpow.pop %v1520
        %v1522 = vmul.f32 %v1416, 1.442695
        %v1523 = vpow.pop %v1522
        %v1524 = vmul.f32 %v1417, 1.442695
        %v1525 = vpow.pop %v1524
        %v1526 = vmul.f32 %v1418, 1.442695
        %v1527 = vpow.pop %v1526
        %v1528 = vmul.f32 %v1419, 1.442695
        %v1529 = vpow.pop %v1528
        %v1530 = vmul.f32 %v1420, 1.442695
        %v1531 = vpow.pop %v1530
        %v1532 = vmul.f32 %v1421, 1.442695
        %v1533 = vpow.pop %v1532
        %v1534 = vmul.f32 %v1422, 1.442695
        %v1535 = vpow.pop %v1534
        %v1536 = vmul.f32 %v1423, 1.442695
        %v1537 = vpow.pop %v1536
        %v1538 = vmul.f32 %v1424, 1.442695
        %v1539 = vpow.pop %v1538
        %v1540 = vmul.f32 %v1425, 1.442695
        %v1541 = vpow.pop %v1540
        %v1542 = vmul.f32 %v1426, 1.442695
        %v1543 = vpow.pop %v1542
        %v1544 = vmul.f32 %v1427, 1.442695
        %v1545 = vpow.pop %v1544
        %v1546 = vmul.f32 %v1428, 1.442695
        %v1547 = vpow.pop %v1546
        %v1548 = vmul.f32 %v1429, 1.442695
        %v1549 = vpow.pop %v1548
        %v1550 = vmul.f32 %v1430, 1.442695
        %v1551 = vpow.pop %v1550
        %v1552 = vmul.f32 %v1431, 1.442695
        %v1553 = vpow.pop %v1552
        %v1554 = vmul.f32 %v1432, 1.442695
        %v1555 = vpow.pop %v1554
        %v1556 = vmul.f32 %v1433, 1.442695
        %v1557 = vpow.pop %v1556
        %v1558 = vmul.f32 %v1434, 1.442695
        %v1559 = vpow.pop %v1558
        %v1560 = vmul.f32 %v1435, 1.442695
        %v1561 = vpow.pop %v1560
        %v1562 = vmul.f32 %v1436, 1.442695
        %v1563 = vpow.pop %v1562
        %v1564 = vmul.f32 %v1437, 1.442695
        %v1565 = vpow.pop %v1564
        %v1566 = vadd.f32 %v1439, 1.0
        %v1567 = vadd.f32 %v1441, 1.0
        %v1568 = vadd.f32 %v1443, 1.0
        %v1569 = vadd.f32 %v1445, 1.0
        %v1570 = vadd.f32 %v1447, 1.0
        %v1571 = vadd.f32 %v1449, 1.0
        %v1572 = vadd.f32 %v1451, 1.0
        %v1573 = vadd.f32 %v1453, 1.0
        %v1574 = vadd.f32 %v1455, 1.0
        %v1575 = vadd.f32 %v1457, 1.0
        %v1576 = vadd.f32 %v1459, 1.0
        %v1577 = vadd.f32 %v1461, 1.0
        %v1578 = vadd.f32 %v1463, 1.0
        %v1579 = vadd.f32 %v1465, 1.0
        %v1580 = vadd.f32 %v1467, 1.0
        %v1581 = vadd.f32 %v1469, 1.0
        %v1582 = vadd.f32 %v1471, 1.0
        %v1583 = vadd.f32 %v1473, 1.0
        %v1584 = vadd.f32 %v1475, 1.0
        %v1585 = vadd.f32 %v1477, 1.0
        %v1586 = vadd.f32 %v1479, 1.0
        %v1587 = vadd.f32 %v1481, 1.0
        %v1588 = vadd.f32 %v1483, 1.0
        %v1589 = vadd.f32 %v1485, 1.0
        %v1590 = vadd.f32 %v1487, 1.0
        %v1591 = vadd.f32 %v1489, 1.0
        %v1592 = vadd.f32 %v1491, 1.0
        %v1593 = vadd.f32 %v1493, 1.0
        %v1594 = vadd.f32 %v1495, 1.0
        %v1595 = vadd.f32 %v1497, 1.0
        %v1596 = vadd.f32 %v1499, 1.0
        %v1597 = vadd.f32 %v1501, 1.0
        %v1598 = vadd.f32 %v1503, 1.0
        %v1599 = vadd.f32 %v1505, 1.0
        %v1600 = vadd.f32 %v1507, 1.0
        %v1601 = vadd.f32 %v1509, 1.0
        %v1602 = vadd.f32 %v1511, 1.0
        %v1603 = vadd.f32 %v1513, 1.0
        %v1604 = vadd.f32 %v1515, 1.0
        %v1605 = vadd.f32 %v1517, 1.0
        %v1606 = vadd.f32 %v1519, 1.0
        %v1607 = vadd.f32 %v1521, 1.0
        %v1608 = vadd.f32 %v1523, 1.0
        %v1609 = vadd.f32 %v1525, 1.0
        %v1610 = vadd.f32 %v1527, 1.0
        %v1611 = vadd.f32 %v1529, 1.0
        %v1612 = vadd.f32 %v1531, 1.0
        %v1613 = vadd.f32 %v1533, 1.0
        %v1614 = vadd.f32 %v1535, 1.0
        %v1615 = vadd.f32 %v1537, 1.0
        %v1616 = vadd.f32 %v1539, 1.0
        %v1617 = vadd.f32 %v1541, 1.0
        %v1618 = vadd.f32 %v1543, 1.0
        %v1619 = vadd.f32 %v1545, 1.0
        %v1620 = vadd.f32 %v1547, 1.0
        %v1621 = vadd.f32 %v1549, 1.0
        %v1622 = vadd.f32 %v1551, 1.0
        %v1623 = vadd.f32 %v1553, 1.0
        %v1624 = vadd.f32 %v1555, 1.0
        %v1625 = vadd.f32 %v1557, 1.0
        %v1626 = vadd.f32 %v1559, 1.0
        %v1627 = vadd.f32 %v1561, 1.0
        %v1628 = vadd.f32 %v1563, 1.0
        %v1629 = vadd.f32 %v1565, 1.0
        %v1630 = vrcp.pop %v1566
        %v1631 = vrcp.pop %v1567
        %v1632 = vrcp.pop %v1568
        %v1633 = vrcp.pop %v1569
        %v1634 = vrcp.pop %v1570
        %v1635 = vrcp.pop %v1571
        %v1636 = vrcp.pop %v1572
        %v1637 = vrcp.pop %v1573
        %v1638 = vrcp.pop %v1574
        %v1639 = vrcp.pop %v1575
        %v1640 = vrcp.pop %v1576
        %v1641 = vrcp.pop %v1577
        %v1642 = vrcp.pop %v1578
        %v1643 = vrcp.pop %v1579
        %v1644 = vrcp.pop %v1580
        %v1645 = vrcp.pop %v1581
        %v1646 = vrcp.pop %v1582
        %v1647 = vrcp.pop %v1583
        %v1648 = vrcp.pop %v1584
        %v1649 = vrcp.pop %v1585
        %v1650 = vrcp.pop %v1586
        %v1651 = vrcp.pop %v1587
        %v1652 = vrcp.pop %v1588
        %v1653 = vrcp.pop %v1589
        %v1654 = vrcp.pop %v1590
        %v1655 = vrcp.pop %v1591
        %v1656 = vrcp.pop %v1592
        %v1657 = vrcp.pop %v1593
        %v1658 = vrcp.pop %v1594
        %v1659 = vrcp.pop %v1595
        %v1660 = vrcp.pop %v1596
        %v1661 = vrcp.pop %v1597
        %v1662 = vrcp.pop %v1598
        %v1663 = vrcp.pop %v1599
        %v1664 = vrcp.pop %v1600
        %v1665 = vrcp.pop %v1601
        %v1666 = vrcp.pop %v1602
        %v1667 = vrcp.pop %v1603
        %v1668 = vrcp.pop %v1604
        %v1669 = vrcp.pop %v1605
        %v1670 = vrcp.pop %v1606
        %v1671 = vrcp.pop %v1607
        %v1672 = vrcp.pop %v1608
        %v1673 = vrcp.pop %v1609
        %v1674 = vrcp.pop %v1610
        %v1675 = vrcp.pop %v1611
        %v1676 = vrcp.pop %v1612
        %v1677 = vrcp.pop %v1613
        %v1678 = vrcp.pop %v1614
        %v1679 = vrcp.pop %v1615
        %v1680 = vrcp.pop %v1616
        %v1681 = vrcp.pop %v1617
        %v1682 = vrcp.pop %v1618
        %v1683 = vrcp.pop %v1619
        %v1684 = vrcp.pop %v1620
        %v1685 = vrcp.pop %v1621
        %v1686 = vrcp.pop %v1622
        %v1687 = vrcp.pop %v1623
        %v1688 = vrcp.pop %v1624
        %v1689 = vrcp.pop %v1625
        %v1690 = vrcp.pop %v1626
        %v1691 = vrcp.pop %v1627
        %v1692 = vrcp.pop %v1628
        %v1693 = vrcp.pop %v1629
        %v1694 = vmul.f32 %v1310, %v1630
        %v1695 = vmul.f32 %v1311, %v1631
        %v1696 = vmul.f32 %v1312, %v1632
        %v1697 = vmul.f32 %v1313, %v1633
        %v1698 = vmul.f32 %v1314, %v1634
        %v1699 = vmul.f32 %v1315, %v1635
        %v1700 = vmul.f32 %v1316, %v1636
        %v1701 = vmul.f32 %v1317, %v1637
        %v1702 = vmul.f32 %v1318, %v1638
        %v1703 = vmul.f32 %v1319, %v1639
        %v1704 = vmul.f32 %v1320, %v1640
        %v1705 = vmul.f32 %v1321, %v1641
        %v1706 = vmul.f32 %v1322, %v1642
        %v1707 = vmul.f32 %v1323, %v1643
        %v1708 = vmul.f32 %v1324, %v1644
        %v1709 = vmul.f32 %v1325, %v1645
        %v1710 = vmul.f32 %v1326, %v1646
        %v1711 = vmul.f32 %v1327, %v1647
        %v1712 = vmul.f32 %v1328, %v1648
        %v1713 = vmul.f32 %v1329, %v1649
        %v1714 = vmul.f32 %v1330, %v1650
        %v1715 = vmul.f32 %v1331, %v1651
        %v1716 = vmul.f32 %v1332, %v1652
        %v1717 = vmul.f32 %v1333, %v1653
        %v1718 = vmul.f32 %v1334, %v1654
        %v1719 = vmul.f32 %v1335, %v1655
        %v1720 = vmul.f32 %v1336, %v1656
        %v1721 = vmul.f32 %v1337, %v1657
        %v1722 = vmul.f32 %v1338, %v1658
        %v1723 = vmul.f32 %v1339, %v1659
        %v1724 = vmul.f32 %v1340, %v1660
        %v1725 = vmul.f32 %v1341, %v1661
        %v1726 = vmul.f32 %v1342, %v1662
        %v1727 = vmul.f32 %v1343, %v1663
        %v1728 = vmul.f32 %v1344, %v1664
        %v1729 = vmul.f32 %v1345, %v1665
        %v1730 = vmul.f32 %v1346, %v1666
        %v1731 = vmul.f32 %v1347, %v1667
        %v1732 = vmul.f32 %v1348, %v1668
        %v1733 = vmul.f32 %v1349, %v1669
        %v1734 = vmul.f32 %v1350, %v1670
        %v1735 = vmul.f32 %v1351, %v1671
        %v1736 = vmul.f32 %v1352, %v1672
        %v1737 = vmul.f32 %v1353, %v1673
        %v1738 = vmul.f32 %v1354, %v1674
        %v1739 = vmul.f32 %v1355, %v1675
        %v1740 = vmul.f32 %v1356, %v1676
        %v1741 = vmul.f32 %v1357, %v1677
        %v1742 = vmul.f32 %v1358, %v1678
        %v1743 = vmul.f32 %v1359, %v1679
        %v1744 = vmul.f32 %v1360, %v1680
        %v1745 = vmul.f32 %v1361, %v1681
        %v1746 = vmul.f32 %v1362, %v1682
        %v1747 = vmul.f32 %v1363, %v1683
        %v1748 = vmul.f32 %v1364, %v1684
        %v1749 = vmul.f32 %v1365, %v1685
        %v1750 = vmul.f32 %v1366, %v1686
        %v1751 = vmul.f32 %v1367, %v1687
        %v1752 = vmul.f32 %v1368, %v1688
        %v1753 = vmul.f32 %v1369, %v1689
        %v1754 = vmul.f32 %v1370, %v1690
        %v1755 = vmul.f32 %v1371, %v1691
        %v1756 = vmul.f32 %v1372, %v1692
        %v1757 = vmul.f32 %v1373, %v1693
        %v1758 = vpack.c.bf16 %v1694, %v1694
        %v1759 = vpack.c.bf16 %v1695, %v1695
        %v1760 = vpack.c.bf16 %v1696, %v1696
        %v1761 = vpack.c.bf16 %v1697, %v1697
        %v1762 = vpack.c.bf16 %v1698, %v1698
        %v1763 = vpack.c.bf16 %v1699, %v1699
        %v1764 = vpack.c.bf16 %v1700, %v1700
        %v1765 = vpack.c.bf16 %v1701, %v1701
        %v1766 = vpack.c.bf16 %v1702, %v1702
        %v1767 = vpack.c.bf16 %v1703, %v1703
        %v1768 = vpack.c.bf16 %v1704, %v1704
        %v1769 = vpack.c.bf16 %v1705, %v1705
        %v1770 = vpack.c.bf16 %v1706, %v1706
        %v1771 = vpack.c.bf16 %v1707, %v1707
        %v1772 = vpack.c.bf16 %v1708, %v1708
        %v1773 = vpack.c.bf16 %v1709, %v1709
        %v1774 = vpack.c.bf16 %v1710, %v1710
        %v1775 = vpack.c.bf16 %v1711, %v1711
        %v1776 = vpack.c.bf16 %v1712, %v1712
        %v1777 = vpack.c.bf16 %v1713, %v1713
        %v1778 = vpack.c.bf16 %v1714, %v1714
        %v1779 = vpack.c.bf16 %v1715, %v1715
        %v1780 = vpack.c.bf16 %v1716, %v1716
        %v1781 = vpack.c.bf16 %v1717, %v1717
        %v1782 = vpack.c.bf16 %v1718, %v1718
        %v1783 = vpack.c.bf16 %v1719, %v1719
        %v1784 = vpack.c.bf16 %v1720, %v1720
        %v1785 = vpack.c.bf16 %v1721, %v1721
        %v1786 = vpack.c.bf16 %v1722, %v1722
        %v1787 = vpack.c.bf16 %v1723, %v1723
        %v1788 = vpack.c.bf16 %v1724, %v1724
        %v1789 = vpack.c.bf16 %v1725, %v1725
        %v1790 = vpack.c.bf16 %v1726, %v1726
        %v1791 = vpack.c.bf16 %v1727, %v1727
        %v1792 = vpack.c.bf16 %v1728, %v1728
        %v1793 = vpack.c.bf16 %v1729, %v1729
        %v1794 = vpack.c.bf16 %v1730, %v1730
        %v1795 = vpack.c.bf16 %v1731, %v1731
        %v1796 = vpack.c.bf16 %v1732, %v1732
        %v1797 = vpack.c.bf16 %v1733, %v1733
        %v1798 = vpack.c.bf16 %v1734, %v1734
        %v1799 = vpack.c.bf16 %v1735, %v1735
        %v1800 = vpack.c.bf16 %v1736, %v1736
        %v1801 = vpack.c.bf16 %v1737, %v1737
        %v1802 = vpack.c.bf16 %v1738, %v1738
        %v1803 = vpack.c.bf16 %v1739, %v1739
        %v1804 = vpack.c.bf16 %v1740, %v1740
        %v1805 = vpack.c.bf16 %v1741, %v1741
        %v1806 = vpack.c.bf16 %v1742, %v1742
        %v1807 = vpack.c.bf16 %v1743, %v1743
        %v1808 = vpack.c.bf16 %v1744, %v1744
        %v1809 = vpack.c.bf16 %v1745, %v1745
        %v1810 = vpack.c.bf16 %v1746, %v1746
        %v1811 = vpack.c.bf16 %v1747, %v1747
        %v1812 = vpack.c.bf16 %v1748, %v1748
        %v1813 = vpack.c.bf16 %v1749, %v1749
        %v1814 = vpack.c.bf16 %v1750, %v1750
        %v1815 = vpack.c.bf16 %v1751, %v1751
        %v1816 = vpack.c.bf16 %v1752, %v1752
        %v1817 = vpack.c.bf16 %v1753, %v1753
        %v1818 = vpack.c.bf16 %v1754, %v1754
        %v1819 = vpack.c.bf16 %v1755, %v1755
        %v1820 = vpack.c.bf16 %v1756, %v1756
        %v1821 = vpack.c.bf16 %v1757, %v1757
        %1822 = vst [vmem:[%s313] sm:$0xf] %v1758
        %1823 = vst [vmem:[%s313 + $0x4] sm:$0xf] %v1759
        %1824 = vst [vmem:[%s313 + $0x8] sm:$0xf] %v1760
        %1825 = vst [vmem:[%s313 + $0xc] sm:$0xf] %v1761
        %1826 = vst [vmem:[%s313 + $0x10] sm:$0xf] %v1762
        %1827 = vst [vmem:[%s313 + $0x14] sm:$0xf] %v1763
        %1828 = vst [vmem:[%s313 + $0x18] sm:$0xf] %v1764
        %1829 = vst [vmem:[%s313 + $0x1c] sm:$0xf] %v1765
        %1830 = vst [vmem:[%s313 + $0x20] sm:$0xf] %v1766
        %1831 = vst [vmem:[%s313 + $0x24] sm:$0xf] %v1767
        %1832 = vst [vmem:[%s313 + $0x28] sm:$0xf] %v1768
        %1833 = vst [vmem:[%s313 + $0x2c] sm:$0xf] %v1769
        %1834 = vst [vmem:[%s313 + $0x30] sm:$0xf] %v1770
        %1835 = vst [vmem:[%s313 + $0x34] sm:$0xf] %v1771
        %1836 = vst [vmem:[%s313 + $0x38] sm:$0xf] %v1772
        %1837 = vst [vmem:[%s313 + $0x3c] sm:$0xf] %v1773
        %1838 = vst [vmem:[%s313 + $0x40] sm:$0xf] %v1774
        %1839 = vst [vmem:[%s313 + $0x44] sm:$0xf] %v1775
        %1840 = vst [vmem:[%s313 + $0x48] sm:$0xf] %v1776
        %1841 = vst [vmem:[%s313 + $0x4c] sm:$0xf] %v1777
        %1842 = vst [vmem:[%s313 + $0x50] sm:$0xf] %v1778
        %1843 = vst [vmem:[%s313 + $0x54] sm:$0xf] %v1779
        %1844 = vst [vmem:[%s313 + $0x58] sm:$0xf] %v1780
        %1845 = vst [vmem:[%s313 + $0x5c] sm:$0xf] %v1781
        %1846 = vst [vmem:[%s313 + $0x60] sm:$0xf] %v1782
        %1847 = vst [vmem:[%s313 + $0x64] sm:$0xf] %v1783
        %1848 = vst [vmem:[%s313 + $0x68] sm:$0xf] %v1784
        %1849 = vst [vmem:[%s313 + $0x6c] sm:$0xf] %v1785
        %1850 = vst [vmem:[%s313 + $0x70] sm:$0xf] %v1786
        %1851 = vst [vmem:[%s313 + $0x74] sm:$0xf] %v1787
        %1852 = vst [vmem:[%s313 + $0x78] sm:$0xf] %v1788
        %1853 = vst [vmem:[%s313 + $0x7c] sm:$0xf] %v1789
        %1854 = vst [vmem:[%s313 + $0x80] sm:$0xf] %v1790
        %1855 = vst [vmem:[%s313 + $0x84] sm:$0xf] %v1791
        %1856 = vst [vmem:[%s313 + $0x88] sm:$0xf] %v1792
        %1857 = vst [vmem:[%s313 + $0x8c] sm:$0xf] %v1793
        %1858 = vst [vmem:[%s313 + $0x90] sm:$0xf] %v1794
        %1859 = vst [vmem:[%s313 + $0x94] sm:$0xf] %v1795
        %1860 = vst [vmem:[%s313 + $0x98] sm:$0xf] %v1796
        %1861 = vst [vmem:[%s313 + $0x9c] sm:$0xf] %v1797
        %1862 = vst [vmem:[%s313 + $0xa0] sm:$0xf] %v1798
        %1863 = vst [vmem:[%s313 + $0xa4] sm:$0xf] %v1799
        %1864 = vst [vmem:[%s313 + $0xa8] sm:$0xf] %v1800
        %1865 = vst [vmem:[%s313 + $0xac] sm:$0xf] %v1801
        %1866 = vst [vmem:[%s313 + $0xb0] sm:$0xf] %v1802
        %1867 = vst [vmem:[%s313 + $0xb4] sm:$0xf] %v1803
        %1868 = vst [vmem:[%s313 + $0xb8] sm:$0xf] %v1804
        %1869 = vst [vmem:[%s313 + $0xbc] sm:$0xf] %v1805
        %1870 = vst [vmem:[%s313 + $0xc0] sm:$0xf] %v1806
        %1871 = vst [vmem:[%s313 + $0xc4] sm:$0xf] %v1807
        %1872 = vst [vmem:[%s313 + $0xc8] sm:$0xf] %v1808
        %1873 = vst [vmem:[%s313 + $0xcc] sm:$0xf] %v1809
        %1874 = vst [vmem:[%s313 + $0xd0] sm:$0xf] %v1810
        %1875 = vst [vmem:[%s313 + $0xd4] sm:$0xf] %v1811
        %1876 = vst [vmem:[%s313 + $0xd8] sm:$0xf] %v1812
        %1877 = vst [vmem:[%s313 + $0xdc] sm:$0xf] %v1813
        %1878 = vst [vmem:[%s313 + $0xe0] sm:$0xf] %v1814
        %1879 = vst [vmem:[%s313 + $0xe4] sm:$0xf] %v1815
        %1880 = vst [vmem:[%s313 + $0xe8] sm:$0xf] %v1816
        %1881 = vst [vmem:[%s313 + $0xec] sm:$0xf] %v1817
        %1882 = vst [vmem:[%s313 + $0xf0] sm:$0xf] %v1818
        %1883 = vst [vmem:[%s313 + $0xf4] sm:$0xf] %v1819
        %1884 = vst [vmem:[%s313 + $0xf8] sm:$0xf] %v1820
        %1885 = vst [vmem:[%s313 + $0xfc] sm:$0xf] %v1821
        %s1886 = sand.u32 %s142, 1
        %s1887 = scalar_lea.sflag [#allocation4], %s1886
        %s1888 = sand.u32 %s142, 1
        %s1889 = smul.addr %s1888, 256
        %s1890 = scalar_lea.vmem [#allocation11], %s1889
        // Predicated region
        $region61: #{tpu_custom_call.1} parent=39 // pred_check
          %p1891 = pneg %p152
        $region62: #{tpu_custom_call.1} parent=39 // pred_check_branch
          %1893 = sbr.rel (%p1891) target = $region64
        $region63: #{tpu_custom_call.1} parent=39 // pred_region
          %s1894 = smul.u32 64, %s24
          %s1895 = ssub.s32 513, %s1894
          %p1896 = scmp.lt.s32.totalorder %s1895, 64
          %s1897 = scalar_select %p1896, %s1895, 64
          %s1898 = smul.u32 4, %s1897
          %s1899 = ssub.s32 256, %s1898
          %s1900 = sshll.u32 %s1899, 4
          %1901 = vsyncadd %s1887, %s1900
          %p1902 = scmp.ne.s32.totalorder 0, %s1898
          %s1903 = smul.addr %s1894, 4
          %s1904 = scalar_lea.hbm %s5, %s1903
          %s1905 = smul.u32 4, %s1897
          %s1906 = sshll.u32 %s1890, 4
          %s1907 = int_to_ptr.vmem [resolvable:$true] %s1906
          %s1908 = sshll.u32 %s1904, 4
          %s1909 = int_to_ptr.hbm [resolvable:$true] %s1908
          %s1910 = sshll.u32 %s1905, 4
          %1914 = dma.vmem_to_hbm [thread:$0]  (%p1902), %s1907, %s1910, %s1909, %s1887, 64, 64, 4
        $region64: #{tpu_custom_call.1} parent=39 // pred_fallthru
          _
      $region40: #{tpu_custom_call.1} parent=5 // pred_fallthru
        _
      %p1915 = scmp.le.s32.totalorder 2, %s19
      // Predicated region
      $region65: #{tpu_custom_call.1} parent=5 // pred_check
        %p1916 = pneg %p1915
      $region66: #{tpu_custom_call.1} parent=5 // pred_check_branch
        %1918 = sbr.rel (%p1916) target = $region68
      $region67: #{tpu_custom_call.1} parent=5 // pred_region
        %s1919 = ssub.s32 %s19, 2
        // Predicated region
        $region69: #{tpu_custom_call.1} parent=67 // pred_check
          %p1920 = pneg %p158
        $region70: #{tpu_custom_call.1} parent=67 // pred_check_branch
          %1922 = sbr.rel (%p1920) target = $region72
        $region71: #{tpu_custom_call.1} parent=67 // pred_region
          %s1923 = sand.u32 %s143, 1
          %s1924 = scalar_lea.sflag [#allocation4], %s1923
          %s1925 = sand.u32 %s143, 1
          %s1926 = smul.addr %s1925, 256
          %s1927 = scalar_lea.vmem [#allocation11], %s1926
          %1929 = dma.done %s1924, 4096
        $region72: #{tpu_custom_call.1} parent=67 // pred_fallthru
          _
      $region68: #{tpu_custom_call.1} parent=5 // pred_fallthru
        _
    $region6: #{tpu_custom_call.1} parent=1 // loop_footer
      %s23 = sadd.s32 1, %s19
    $region7: #{tpu_custom_call.1} parent=1 // loop_footer_branch
      %18 = sbr.rel target = $region3
    $region8: #{tpu_custom_call.1} parent=1 // loop_exit
      _
    %1930 = vsyncpa [#allocation3], 1
    %s1931 = scalar_lea.sflag [#allocation3], 1
    %1932 = vsyncpa %s1931, 1
    %1933 = vsyncpa [#allocation6], 1
    %1934 = vsyncpa [#allocation9], 1
    %1935 = vsyncpa [#allocation4], 1
    %s1936 = scalar_lea.sflag [#allocation4], 1
    %1937 = vsyncpa %s1936, 1

</llo_original>
